<compile_context>
chip_gen: v5e
topology: v5e:2x2
jax: 0.10.0
libtpu: 0.0.40
codegen_flags: <defaults>
</compile_context>

<pallas_src>
import functools

import jax
import jax.numpy as jnp
import numpy as np
from jax.experimental import pallas as pl
from jax.experimental.pallas import tpu as pltpu


# ----------------------------------------------------------------------------
# Fused SEBottleneck kernel: a block of B images, each kept as (C, HW).
# ----------------------------------------------------------------------------
def _se_bottleneck_kernel(
    x_ref,               # (B, Cin, HW) f32
    w1_ref, b1_ref,      # (P, Cin) bf16, (P, 1) f32      (BN1 scale folded into w1)
    w2_ref, b2_ref,      # (P, 9P) bf16, (P, 1) f32       (BN2 scale folded into w2)
    w3_ref, b3_ref,      # (C, P) bf16, (C, 1) f32        (BN3 scale folded into w3)
    sw1_ref, sb1_ref,    # (C, Cr) f32, (1, Cr) f32       (SE fc1 weight stored as W1^T)
    sw2_ref, sb2_ref,    # (C, Cr) f32, (C, 1) f32        (SE fc2 weight stored as-is)
    o_ref,               # (B, C, HW) f32
    hp_ref,              # VMEM scratch (P, PAD + HW + PAD) bf16  -- conv2 halo
    tap_ref,             # VMEM scratch (9P, HW) bf16             -- im2col block
    *, B, H, W, PAD):
    HW = H * W
    P = w1_ref.shape[0]

    # Zero the halo pads.  They are never overwritten, so once per core would
    # suffice -- but under a "parallel" grid axis (megacore) a core may never
    # execute program_id==0, so keep it unconditional (two tiny stores/step).
    hp_ref[:, pl.ds(0, PAD)] = jnp.zeros((P, PAD), jnp.bfloat16)
    hp_ref[:, pl.ds(PAD + HW, PAD)] = jnp.zeros((P, PAD), jnp.bfloat16)

    # Column-boundary masks shared by all images / taps (lane axis = flat HW).
    col = jax.lax.broadcasted_iota(jnp.int32, (1, HW), 1) % W
    not_first_col = col != 0          # valid output lanes for a dx = -1 tap
    not_last_col = col != (W - 1)     # valid output lanes for a dx = +1 tap

    inv_hw = jnp.float32(1.0 / HW)

    for b in range(B):                # static unroll over images in this block
        x_chw = x_ref[b]                                        # (Cin, HW) f32 (residual)

        # ---- conv1 (1x1) + bn1 bias + relu -> (P, HW) ----------------------
        h1 = jnp.dot(w1_ref[...], x_chw.astype(jnp.bfloat16),
                     preferred_element_type=jnp.float32)
        h1 = jnp.maximum(h1 + b1_ref[...], 0.0)

        # ---- conv2 (3x3, pad=1) + bn2 bias + relu --------------------------
        # Write h1 once (bf16, lane-aligned) into the halo scratch; read the 9
        # lane-shifted taps (static slices), mask the row-wraparound lanes,
        # pack them into one (9P, HW) block and do a single K=9P matmul.
        hp_ref[:, pl.ds(PAD, HW)] = h1.astype(jnp.bfloat16)
        for ky in range(3):
            for kx in range(3):
                off = (ky - 1) * W + (kx - 1)
                tap = hp_ref[:, pl.ds(PAD + off, HW)]           # (P, HW) bf16
                if kx == 0:
                    tap = jnp.where(not_first_col, tap, jnp.zeros_like(tap))
                elif kx == 2:
                    tap = jnp.where(not_last_col, tap, jnp.zeros_like(tap))
                tap_ref[pl.ds((ky * 3 + kx) * P, P), :] = tap
        h2 = jnp.dot(w2_ref[...], tap_ref[...],
                     preferred_element_type=jnp.float32)
        h2 = jnp.maximum(h2 + b2_ref[...], 0.0)                 # (P, HW)

        # ---- conv3 (1x1) + bn3 bias (no relu) -> (C, HW) -------------------
        h3 = jnp.dot(w3_ref[...], h2.astype(jnp.bfloat16),
                     preferred_element_type=jnp.float32)
        h3 = h3 + b3_ref[...]

        # ---- SE: GAP -> fc1 -> relu -> fc2 -> sigmoid -----------------------
        # Broadcast-multiply + tiny reductions: no 1-lane matmuls, no transposes.
        pooled = jnp.sum(h3, axis=1, keepdims=True) * inv_hw            # (C, 1)
        g1 = jnp.sum(sw1_ref[...] * pooled, axis=0, keepdims=True)      # (1, Cr)
        g1 = jnp.maximum(g1 + sb1_ref[...], 0.0)
        g2 = jnp.sum(sw2_ref[...] * g1, axis=1, keepdims=True)          # (C, 1)
        g2 = g2 + sb2_ref[...]
        gate = pl.reciprocal(1.0 + jnp.exp(-g2), approx=True)           # sigmoid (EUP)

        # ---- channel gate + residual + final relu (lane-dense store) -------
        o_ref[b] = jnp.maximum(h3 * gate + x_chw, 0.0).astype(o_ref.dtype)


# ----------------------------------------------------------------------------
# Wrapper: NCHW in, NCHW out.  No XLA-side layout plumbing needed.
# ----------------------------------------------------------------------------
def se_bottleneck_forward(x_nchw, kp, stride=1, images_per_block=None):
    N, Cin, H, W = x_nchw.shape
    P = kp["w1"].shape[0]
    C = kp["w3"].shape[0]
    Cr = kp["sw1"].shape[1]
    HW = H * W

    # TODO(synk): stride > 1 and the downsample branch are not implemented --
    # this module instance uses downsample=None (identity residual).
    assert stride == 1 and Cin == C, "identity residual needs stride=1, Cin == planes*4"
    assert HW % 128 == 0 and Cin % 8 == 0 and C % 8 == 0, \
        "flattened spatial dim must be a multiple of 128 and channels multiples of 8"

    PAD = ((W + 1 + 127) // 128) * 128           # lane-aligned halo, >= W + 1
    B_BLK = images_per_block if images_per_block is not None else min(N, 4)
    assert N % B_BLK == 0

    x = x_nchw.reshape(N, Cin, HW).astype(jnp.float32)
    kernel = functools.partial(_se_bottleneck_kernel, B=B_BLK, H=H, W=W, PAD=PAD)
    const2 = lambda n: (0, 0)

    out = pl.pallas_call(
        kernel,
        out_shape=jax.ShapeDtypeStruct((N, C, HW), jnp.float32),
        grid=(N // B_BLK,),
        in_specs=[
            pl.BlockSpec((B_BLK, Cin, HW), lambda n: (n, 0, 0)),
            pl.BlockSpec((P, Cin), const2),       # conv1 weight (VMEM-resident)
            pl.BlockSpec((P, 1), const2),
            pl.BlockSpec((P, 9 * P), const2),     # conv2 weight (VMEM-resident)
            pl.BlockSpec((P, 1), const2),
            pl.BlockSpec((C, P), const2),         # conv3 weight (VMEM-resident)
            pl.BlockSpec((C, 1), const2),
            pl.BlockSpec((C, Cr), const2),        # SE fc1 weight (transposed)
            pl.BlockSpec((1, Cr), const2),
            pl.BlockSpec((C, Cr), const2),        # SE fc2 weight
            pl.BlockSpec((C, 1), const2),
        ],
        out_specs=pl.BlockSpec((B_BLK, C, HW), lambda n: (n, 0, 0)),
        scratch_shapes=[
            pltpu.VMEM((P, PAD + HW + PAD), jnp.bfloat16),   # conv2 halo (long axis on lanes)
            pltpu.VMEM((9 * P, HW), jnp.bfloat16),           # im2col tap block
        ],
        compiler_params=pltpu.CompilerParams(
            dimension_semantics=("parallel",)),
        # TODO(synk): for real SE-ResNet shapes (C>=256, HW=3136) add an HW-tile
        # grid axis and set vmem_limit_bytes explicitly for v7x's 64 MiB VMEM.
    )(
        x,
        kp["w1"], kp["b1"], kp["w2"], kp["b2"], kp["w3"], kp["b3"],
        kp["sw1"], kp["sb1"], kp["sw2"], kp["sb2"],
    )
    return out.reshape(N, C, H, W)


# ----------------------------------------------------------------------------
# Deterministic synthetic parameters in PyTorch layout (eval-mode BN folded to
# per-channel scale/bias), plus the wrapper-side prep that folds BN scales into
# the conv weights and lays everything out channels-first for the kernel.
# ----------------------------------------------------------------------------
def init_params(key, inplanes, planes, reduction=16):
    expansion = 4
    cout = planes * expansion
    cr = cout // reduction
    keys = jax.random.split(key, 10)
    eps = 1e-5

    def bn_fold(k, c):
        kg, kb, km, kv = jax.random.split(k, 4)
        gamma = 1.0 + 0.1 * jax.random.normal(kg, (c,), jnp.float32)
        beta = 0.1 * jax.random.normal(kb, (c,), jnp.float32)
        mean = 0.1 * jax.random.normal(km, (c,), jnp.float32)
        var = 1.0 + 0.1 * jnp.abs(jax.random.normal(kv, (c,), jnp.float32))
        scale = gamma / jnp.sqrt(var + eps)
        bias = beta - mean * scale
        return scale, bias

    p = {}
    p["conv1_w"] = 0.1 * jax.random.normal(keys[0], (planes, inplanes), jnp.float32)
    p["bn1_scale"], p["bn1_bias"] = bn_fold(keys[1], planes)
    p["conv2_w"] = 0.1 * jax.random.normal(keys[2], (planes, planes, 3, 3), jnp.float32)
    p["bn2_scale"], p["bn2_bias"] = bn_fold(keys[3], planes)
    p["conv3_w"] = 0.1 * jax.random.normal(keys[4], (cout, planes), jnp.float32)
    p["bn3_scale"], p["bn3_bias"] = bn_fold(keys[5], cout)
    # SE block: Linear(cout -> cout//r) -> ReLU -> Linear(cout//r -> cout) -> Sigmoid
    p["se_w1"] = 0.1 * jax.random.normal(keys[6], (cr, cout), jnp.float32)
    p["se_b1"] = 0.1 * jax.random.normal(keys[7], (cr,), jnp.float32)
    p["se_w2"] = 0.1 * jax.random.normal(keys[8], (cout, cr), jnp.float32)
    p["se_b2"] = 0.1 * jax.random.normal(keys[9], (cout,), jnp.float32)
    return p


def prepare_kernel_params(p):
    planes = p["conv1_w"].shape[0]
    cout = p["conv3_w"].shape[0]
    cr = p["se_w1"].shape[0]

    kp = {}
    kp["w1"] = (p["conv1_w"] * p["bn1_scale"][:, None]).astype(jnp.bfloat16)   # (P, Cin)
    kp["b1"] = p["bn1_bias"].reshape(planes, 1)
    # conv2: OIHW -> (co, ky, kx, ci) -> (P, 9P); column index (ky*3+kx)*P + ci
    # matches the in-kernel im2col tap block layout.
    w2 = jnp.transpose(p["conv2_w"], (0, 2, 3, 1)).reshape(planes, 9 * planes)
    kp["w2"] = (w2 * p["bn2_scale"][:, None]).astype(jnp.bfloat16)
    kp["b2"] = p["bn2_bias"].reshape(planes, 1)
    kp["w3"] = (p["conv3_w"] * p["bn3_scale"][:, None]).astype(jnp.bfloat16)   # (C, P)
    kp["b3"] = p["bn3_bias"].reshape(cout, 1)
    kp["sw1"] = jnp.transpose(p["se_w1"])          # (C, Cr): sw1[c, r] = W1[r, c]
    kp["sb1"] = p["se_b1"].reshape(1, cr)
    kp["sw2"] = p["se_w2"]                         # (C, Cr)
    kp["sb2"] = p["se_b2"].reshape(cout, 1)
    return kp


# ----------------------------------------------------------------------------
# Pure-JAX reference (f32) of the PyTorch module for correctness checking.
# ----------------------------------------------------------------------------
def reference_forward(x, p):
    def bnf(h, s, b):
        return h * s[None, :, None, None] + b[None, :, None, None]
    h = jnp.einsum("oi,nihw->nohw", p["conv1_w"], x)
    h = jax.nn.relu(bnf(h, p["bn1_scale"], p["bn1_bias"]))
    h = jax.lax.conv_general_dilated(
        h, p["conv2_w"], window_strides=(1, 1), padding=((1, 1), (1, 1)),
        dimension_numbers=("NCHW", "OIHW", "NCHW"))
    h = jax.nn.relu(bnf(h, p["bn2_scale"], p["bn2_bias"]))
    h = jnp.einsum("oi,nihw->nohw", p["conv3_w"], h)
    h = bnf(h, p["bn3_scale"], p["bn3_bias"])
    pooled = h.mean(axis=(2, 3))                                   # (N, C)
    g = jax.nn.relu(pooled @ p["se_w1"].T + p["se_b1"][None, :])
    g = jax.nn.sigmoid(g @ p["se_w2"].T + p["se_b2"][None, :])
    h = h * g[:, :, None, None]
    return jax.nn.relu(h + x)


if __name__ == "__main__":
    key = jax.random.PRNGKey(0)
    k_x, k_p = jax.random.split(key)

    # SEBottleneck(inplanes=32, planes=8, stride=1, downsample=None, reduction=16)
    inplanes, planes, reduction = 32, 8, 16
    N, H, W = 2, 16, 16

    x = jax.random.normal(k_x, (N, inplanes, H, W), jnp.float32)   # NCHW, like PyTorch
    params = init_params(k_p, inplanes, planes, reduction)
    kparams = prepare_kernel_params(params)

    out = se_bottleneck_forward(x, kparams, stride=1)              # whole batch, one grid step
    out = jax.block_until_ready(out)
    assert out.shape == (N, planes * 4, H, W), out.shape

    # Correctness vs. f32 reference (loose tolerance for bf16 MXU operands and
    # the approximate-reciprocal sigmoid).
    ref = reference_forward(x, params)
    np.testing.assert_allclose(np.asarray(out), np.asarray(ref), rtol=5e-2, atol=5e-2)

    print("KERNEL_OK")
</pallas_src>

<mosaic_0001>
module attributes {stable_mosaic.version = 11 : i64} {
  func.func @_se_bottleneck_kernel(%arg0: i32, %arg1: memref<2x32x256xf32, #tpu.memory_space<vmem>>, %arg2: memref<8x32xbf16, #tpu.memory_space<vmem>>, %arg3: memref<8x1xf32, #tpu.memory_space<vmem>>, %arg4: memref<8x72xbf16, #tpu.memory_space<vmem>>, %arg5: memref<8x1xf32, #tpu.memory_space<vmem>>, %arg6: memref<32x8xbf16, #tpu.memory_space<vmem>>, %arg7: memref<32x1xf32, #tpu.memory_space<vmem>>, %arg8: memref<32x2xf32, #tpu.memory_space<vmem>>, %arg9: memref<1x2xf32, #tpu.memory_space<vmem>>, %arg10: memref<32x2xf32, #tpu.memory_space<vmem>>, %arg11: memref<32x1xf32, #tpu.memory_space<vmem>>, %arg12: memref<2x32x256xf32, #tpu.memory_space<vmem>>, %arg13: memref<8x512xbf16, #tpu.memory_space<vmem>>, %arg14: memref<72x256xbf16, #tpu.memory_space<vmem>>) attributes {dimension_semantics = [#tpu.dimension_semantics<parallel>], iteration_bounds = array<i64: 1>, scalar_prefetch = 0 : i64, scratch_operands = 2 : i64, tpu.core_type = #tpu.core_type<tc>, window_params = [{transform_indices = @transform_0, window_bounds = array<i64: 2, 32, 256>}, {pipeline_mode = #tpu.pipeline_mode<synchronous>, transform_indices = @transform_1, window_bounds = array<i64: 8, 32>}, {pipeline_mode = #tpu.pipeline_mode<synchronous>, transform_indices = @transform_2, window_bounds = array<i64: 8, 1>}, {pipeline_mode = #tpu.pipeline_mode<synchronous>, transform_indices = @transform_3, window_bounds = array<i64: 8, 72>}, {pipeline_mode = #tpu.pipeline_mode<synchronous>, transform_indices = @transform_4, window_bounds = array<i64: 8, 1>}, {pipeline_mode = #tpu.pipeline_mode<synchronous>, transform_indices = @transform_5, window_bounds = array<i64: 32, 8>}, {pipeline_mode = #tpu.pipeline_mode<synchronous>, transform_indices = @transform_6, window_bounds = array<i64: 32, 1>}, {pipeline_mode = #tpu.pipeline_mode<synchronous>, transform_indices = @transform_7, window_bounds = array<i64: 32, 2>}, {pipeline_mode = #tpu.pipeline_mode<synchronous>, transform_indices = @transform_8, window_bounds = array<i64: 1, 2>}, {pipeline_mode = #tpu.pipeline_mode<synchronous>, transform_indices = @transform_9, window_bounds = array<i64: 32, 2>}, {pipeline_mode = #tpu.pipeline_mode<synchronous>, transform_indices = @transform_10, window_bounds = array<i64: 32, 1>}, {transform_indices = @transform_11, window_bounds = array<i64: 2, 32, 256>}]} {
    %cst = arith.constant 0.000000e+00 : bf16
    %0 = vector.broadcast %cst : bf16 to vector<8x128xbf16>
    %c0 = arith.constant 0 : index
    %c0_0 = arith.constant 0 : index
    %1 = vector.load %arg13[%c0, %c0_0] : memref<8x512xbf16, #tpu.memory_space<vmem>>, vector<8x128xbf16>
    tpu.vector_store %arg13[%c0, %c0_0], %0 {strides = array<i32>} : memref<8x512xbf16, #tpu.memory_space<vmem>>, vector<8x128xbf16>,
    %cst_1 = arith.constant 0.000000e+00 : bf16
    %2 = vector.broadcast %cst_1 : bf16 to vector<8x128xbf16>
    %c0_2 = arith.constant 0 : index
    %c384 = arith.constant 384 : index
    %3 = vector.load %arg13[%c0_2, %c384] : memref<8x512xbf16, #tpu.memory_space<vmem>>, vector<8x128xbf16>
    tpu.vector_store %arg13[%c0_2, %c384], %2 {strides = array<i32>} : memref<8x512xbf16, #tpu.memory_space<vmem>>, vector<8x128xbf16>,
    %4 = tpu.iota {dimensions = array<i32: 1>} : vector<1x256xi32>
    %c16_i32 = arith.constant 16 : i32
    %c0_i32 = arith.constant 0 : i32
    %5 = arith.cmpi eq, %c16_i32, %c0_i32 : i32
    %c1_i32 = arith.constant 1 : i32
    %6 = arith.select %5, %c1_i32, %c16_i32 : i32
    %7 = vector.broadcast %6 : i32 to vector<1x256xi32>
    %8 = arith.remsi %4, %7 : vector<1x256xi32>
    %c0_i32_3 = arith.constant 0 : i32
    %9 = vector.broadcast %c0_i32_3 : i32 to vector<1x256xi32>
    %10 = arith.cmpi ne, %8, %9 : vector<1x256xi32>
    %c0_i32_4 = arith.constant 0 : i32
    %11 = vector.broadcast %c0_i32_4 : i32 to vector<1x256xi32>
    %12 = arith.cmpi slt, %8, %11 : vector<1x256xi32>
    %c0_i32_5 = arith.constant 0 : i32
    %13 = arith.cmpi slt, %6, %c0_i32_5 : i32
    %14 = vector.broadcast %13 : i1 to vector<1x256xi1>
    %15 = vector.broadcast %14 : vector<1x256xi1> to vector<1x256xi1>
    %16 = arith.xori %12, %15 : vector<1x256xi1>
    %17 = arith.andi %16, %10 : vector<1x256xi1>
    %18 = vector.broadcast %6 : i32 to vector<1x256xi32>
    %19 = arith.addi %8, %18 : vector<1x256xi32>
    %20 = arith.select %17, %19, %8 : vector<1x256xi1>, vector<1x256xi32>
    %c0_i32_6 = arith.constant 0 : i32
    %21 = vector.broadcast %c0_i32_6 : i32 to vector<1x256xi32>
    %22 = arith.cmpi ne, %20, %21 : vector<1x256xi32>
    %c15_i32 = arith.constant 15 : i32
    %23 = vector.broadcast %c15_i32 : i32 to vector<1x256xi32>
    %24 = arith.cmpi ne, %20, %23 : vector<1x256xi32>
    %c0_7 = arith.constant 0 : index
    %c0_8 = arith.constant 0 : index
    %c0_9 = arith.constant 0 : index
    %25 = vector.load %arg1[%c0_7, %c0_8, %c0_9] : memref<2x32x256xf32, #tpu.memory_space<vmem>>, vector<1x32x256xf32>
    %26 = vector.shape_cast %25 : vector<1x32x256xf32> to vector<32x256xf32>
    %c0_10 = arith.constant 0 : index
    %c0_11 = arith.constant 0 : index
    %27 = vector.load %arg2[%c0_10, %c0_11] : memref<8x32xbf16, #tpu.memory_space<vmem>>, vector<8x32xbf16>
    %28 = arith.truncf %26 : vector<32x256xf32> to vector<32x256xbf16>
    %cst_12 = arith.constant dense<0.000000e+00> : vector<8x256xf32>
    %29 = tpu.matmul %27, %28, %cst_12 {dimension_numbers = #tpu.dot_dimension_numbers<[1], [0], [0], [1], [0, 0, 1, 1], [], []>} : vector<8x32xbf16>, vector<32x256xbf16>, vector<8x256xf32> -> vector<8x256xf32>
    %c0_13 = arith.constant 0 : index
    %c0_14 = arith.constant 0 : index
    %30 = vector.load %arg3[%c0_13, %c0_14] : memref<8x1xf32, #tpu.memory_space<vmem>>, vector<8x1xf32>
    %31 = vector.broadcast %30 : vector<8x1xf32> to vector<8x256xf32>
    %32 = arith.addf %29, %31 : vector<8x256xf32>
    %cst_15 = arith.constant 0.000000e+00 : f32
    %33 = vector.broadcast %cst_15 : f32 to vector<8x256xf32>
    %34 = arith.maximumf %32, %33 : vector<8x256xf32>
    %35 = arith.truncf %34 : vector<8x256xf32> to vector<8x256xbf16>
    %c0_16 = arith.constant 0 : index
    %c128 = arith.constant 128 : index
    %36 = vector.load %arg13[%c0_16, %c128] : memref<8x512xbf16, #tpu.memory_space<vmem>>, vector<8x256xbf16>
    tpu.vector_store %arg13[%c0_16, %c128], %35 {strides = array<i32>} : memref<8x512xbf16, #tpu.memory_space<vmem>>, vector<8x256xbf16>,
    %c0_17 = arith.constant 0 : index
    %c111 = arith.constant 111 : index
    %37 = vector.load %arg13[%c0_17, %c111] : memref<8x512xbf16, #tpu.memory_space<vmem>>, vector<8x256xbf16>
    %cst_18 = arith.constant 0.000000e+00 : bf16
    %38 = vector.broadcast %cst_18 : bf16 to vector<8x256xbf16>
    %39 = vector.shape_cast %22 : vector<1x256xi1> to vector<1x256xi1>
    %40 = vector.broadcast %39 : vector<1x256xi1> to vector<8x256xi1>
    %41 = arith.select %40, %37, %38 : vector<8x256xi1>, vector<8x256xbf16>
    %c0_19 = arith.constant 0 : index
    %c0_20 = arith.constant 0 : index
    %42 = vector.load %arg14[%c0_19, %c0_20] : memref<72x256xbf16, #tpu.memory_space<vmem>>, vector<8x256xbf16>
    tpu.vector_store %arg14[%c0_19, %c0_20], %41 {strides = array<i32>} : memref<72x256xbf16, #tpu.memory_space<vmem>>, vector<8x256xbf16>,
    %c0_21 = arith.constant 0 : index
    %c112 = arith.constant 112 : index
    %43 = vector.load %arg13[%c0_21, %c112] : memref<8x512xbf16, #tpu.memory_space<vmem>>, vector<8x256xbf16>
    %c8 = arith.constant 8 : index
    %c0_22 = arith.constant 0 : index
    %44 = vector.load %arg14[%c8, %c0_22] : memref<72x256xbf16, #tpu.memory_space<vmem>>, vector<8x256xbf16>
    tpu.vector_store %arg14[%c8, %c0_22], %43 {strides = array<i32>} : memref<72x256xbf16, #tpu.memory_space<vmem>>, vector<8x256xbf16>,
    %c0_23 = arith.constant 0 : index
    %c113 = arith.constant 113 : index
    %45 = vector.load %arg13[%c0_23, %c113] : memref<8x512xbf16, #tpu.memory_space<vmem>>, vector<8x256xbf16>
    %cst_24 = arith.constant 0.000000e+00 : bf16
    %46 = vector.broadcast %cst_24 : bf16 to vector<8x256xbf16>
    %47 = vector.shape_cast %24 : vector<1x256xi1> to vector<1x256xi1>
    %48 = vector.broadcast %47 : vector<1x256xi1> to vector<8x256xi1>
    %49 = arith.select %48, %45, %46 : vector<8x256xi1>, vector<8x256xbf16>
    %c16 = arith.constant 16 : index
    %c0_25 = arith.constant 0 : index
    %50 = vector.load %arg14[%c16, %c0_25] : memref<72x256xbf16, #tpu.memory_space<vmem>>, vector<8x256xbf16>
    tpu.vector_store %arg14[%c16, %c0_25], %49 {strides = array<i32>} : memref<72x256xbf16, #tpu.memory_space<vmem>>, vector<8x256xbf16>,
    %c0_26 = arith.constant 0 : index
    %c127 = arith.constant 127 : index
    %51 = vector.load %arg13[%c0_26, %c127] : memref<8x512xbf16, #tpu.memory_space<vmem>>, vector<8x256xbf16>
    %cst_27 = arith.constant 0.000000e+00 : bf16
    %52 = vector.broadcast %cst_27 : bf16 to vector<8x256xbf16>
    %53 = vector.shape_cast %22 : vector<1x256xi1> to vector<1x256xi1>
    %54 = vector.broadcast %53 : vector<1x256xi1> to vector<8x256xi1>
    %55 = arith.select %54, %51, %52 : vector<8x256xi1>, vector<8x256xbf16>
    %c24 = arith.constant 24 : index
    %c0_28 = arith.constant 0 : index
    %56 = vector.load %arg14[%c24, %c0_28] : memref<72x256xbf16, #tpu.memory_space<vmem>>, vector<8x256xbf16>
    tpu.vector_store %arg14[%c24, %c0_28], %55 {strides = array<i32>} : memref<72x256xbf16, #tpu.memory_space<vmem>>, vector<8x256xbf16>,
    %c0_29 = arith.constant 0 : index
    %c128_30 = arith.constant 128 : index
    %57 = vector.load %arg13[%c0_29, %c128_30] : memref<8x512xbf16, #tpu.memory_space<vmem>>, vector<8x256xbf16>
    %c32 = arith.constant 32 : index
    %c0_31 = arith.constant 0 : index
    %58 = vector.load %arg14[%c32, %c0_31] : memref<72x256xbf16, #tpu.memory_space<vmem>>, vector<8x256xbf16>
    tpu.vector_store %arg14[%c32, %c0_31], %57 {strides = array<i32>} : memref<72x256xbf16, #tpu.memory_space<vmem>>, vector<8x256xbf16>,
    %c0_32 = arith.constant 0 : index
    %c129 = arith.constant 129 : index
    %59 = vector.load %arg13[%c0_32, %c129] : memref<8x512xbf16, #tpu.memory_space<vmem>>, vector<8x256xbf16>
    %cst_33 = arith.constant 0.000000e+00 : bf16
    %60 = vector.broadcast %cst_33 : bf16 to vector<8x256xbf16>
    %61 = vector.shape_cast %24 : vector<1x256xi1> to vector<1x256xi1>
    %62 = vector.broadcast %61 : vector<1x256xi1> to vector<8x256xi1>
    %63 = arith.select %62, %59, %60 : vector<8x256xi1>, vector<8x256xbf16>
    %c40 = arith.constant 40 : index
    %c0_34 = arith.constant 0 : index
    %64 = vector.load %arg14[%c40, %c0_34] : memref<72x256xbf16, #tpu.memory_space<vmem>>, vector<8x256xbf16>
    tpu.vector_store %arg14[%c40, %c0_34], %63 {strides = array<i32>} : memref<72x256xbf16, #tpu.memory_space<vmem>>, vector<8x256xbf16>,
    %c0_35 = arith.constant 0 : index
    %c143 = arith.constant 143 : index
    %65 = vector.load %arg13[%c0_35, %c143] : memref<8x512xbf16, #tpu.memory_space<vmem>>, vector<8x256xbf16>
    %cst_36 = arith.constant 0.000000e+00 : bf16
    %66 = vector.broadcast %cst_36 : bf16 to vector<8x256xbf16>
    %67 = vector.shape_cast %22 : vector<1x256xi1> to vector<1x256xi1>
    %68 = vector.broadcast %67 : vector<1x256xi1> to vector<8x256xi1>
    %69 = arith.select %68, %65, %66 : vector<8x256xi1>, vector<8x256xbf16>
    %c48 = arith.constant 48 : index
    %c0_37 = arith.constant 0 : index
    %70 = vector.load %arg14[%c48, %c0_37] : memref<72x256xbf16, #tpu.memory_space<vmem>>, vector<8x256xbf16>
    tpu.vector_store %arg14[%c48, %c0_37], %69 {strides = array<i32>} : memref<72x256xbf16, #tpu.memory_space<vmem>>, vector<8x256xbf16>,
    %c0_38 = arith.constant 0 : index
    %c144 = arith.constant 144 : index
    %71 = vector.load %arg13[%c0_38, %c144] : memref<8x512xbf16, #tpu.memory_space<vmem>>, vector<8x256xbf16>
    %c56 = arith.constant 56 : index
    %c0_39 = arith.constant 0 : index
    %72 = vector.load %arg14[%c56, %c0_39] : memref<72x256xbf16, #tpu.memory_space<vmem>>, vector<8x256xbf16>
    tpu.vector_store %arg14[%c56, %c0_39], %71 {strides = array<i32>} : memref<72x256xbf16, #tpu.memory_space<vmem>>, vector<8x256xbf16>,
    %c0_40 = arith.constant 0 : index
    %c145 = arith.constant 145 : index
    %73 = vector.load %arg13[%c0_40, %c145] : memref<8x512xbf16, #tpu.memory_space<vmem>>, vector<8x256xbf16>
    %cst_41 = arith.constant 0.000000e+00 : bf16
    %74 = vector.broadcast %cst_41 : bf16 to vector<8x256xbf16>
    %75 = vector.shape_cast %24 : vector<1x256xi1> to vector<1x256xi1>
    %76 = vector.broadcast %75 : vector<1x256xi1> to vector<8x256xi1>
    %77 = arith.select %76, %73, %74 : vector<8x256xi1>, vector<8x256xbf16>
    %c64 = arith.constant 64 : index
    %c0_42 = arith.constant 0 : index
    %78 = vector.load %arg14[%c64, %c0_42] : memref<72x256xbf16, #tpu.memory_space<vmem>>, vector<8x256xbf16>
    tpu.vector_store %arg14[%c64, %c0_42], %77 {strides = array<i32>} : memref<72x256xbf16, #tpu.memory_space<vmem>>, vector<8x256xbf16>,
    %c0_43 = arith.constant 0 : index
    %c0_44 = arith.constant 0 : index
    %79 = vector.load %arg4[%c0_43, %c0_44] : memref<8x72xbf16, #tpu.memory_space<vmem>>, vector<8x72xbf16>
    %c0_45 = arith.constant 0 : index
    %c0_46 = arith.constant 0 : index
    %80 = vector.load %arg14[%c0_45, %c0_46] : memref<72x256xbf16, #tpu.memory_space<vmem>>, vector<72x256xbf16>
    %cst_47 = arith.constant dense<0.000000e+00> : vector<8x256xf32>
    %81 = tpu.matmul %79, %80, %cst_47 {dimension_numbers = #tpu.dot_dimension_numbers<[1], [0], [0], [1], [0, 0, 1, 1], [], []>} : vector<8x72xbf16>, vector<72x256xbf16>, vector<8x256xf32> -> vector<8x256xf32>
    %c0_48 = arith.constant 0 : index
    %c0_49 = arith.constant 0 : index
    %82 = vector.load %arg5[%c0_48, %c0_49] : memref<8x1xf32, #tpu.memory_space<vmem>>, vector<8x1xf32>
    %83 = vector.broadcast %82 : vector<8x1xf32> to vector<8x256xf32>
    %84 = arith.addf %81, %83 : vector<8x256xf32>
    %cst_50 = arith.constant 0.000000e+00 : f32
    %85 = vector.broadcast %cst_50 : f32 to vector<8x256xf32>
    %86 = arith.maximumf %84, %85 : vector<8x256xf32>
    %c0_51 = arith.constant 0 : index
    %c0_52 = arith.constant 0 : index
    %87 = vector.load %arg6[%c0_51, %c0_52] : memref<32x8xbf16, #tpu.memory_space<vmem>>, vector<32x8xbf16>
    %88 = arith.truncf %86 : vector<8x256xf32> to vector<8x256xbf16>
    %cst_53 = arith.constant dense<0.000000e+00> : vector<32x256xf32>
    %89 = tpu.matmul %87, %88, %cst_53 {dimension_numbers = #tpu.dot_dimension_numbers<[1], [0], [0], [1], [0, 0, 1, 1], [], []>} : vector<32x8xbf16>, vector<8x256xbf16>, vector<32x256xf32> -> vector<32x256xf32>
    %c0_54 = arith.constant 0 : index
    %c0_55 = arith.constant 0 : index
    %90 = vector.load %arg7[%c0_54, %c0_55] : memref<32x1xf32, #tpu.memory_space<vmem>>, vector<32x1xf32>
    %91 = vector.broadcast %90 : vector<32x1xf32> to vector<32x256xf32>
    %92 = arith.addf %89, %91 : vector<32x256xf32>
    %cst_56 = arith.constant dense<0.000000e+00> : vector<32xf32>
    %93 = vector.multi_reduction <add>, %92, %cst_56 [1] : vector<32x256xf32> to vector<32xf32>
    %94 = vector.shape_cast %93 : vector<32xf32> to vector<32x1xf32>
    %cst_57 = arith.constant 3.906250e-03 : f32
    %95 = vector.broadcast %cst_57 : f32 to vector<32x1xf32>
    %96 = arith.mulf %94, %95 : vector<32x1xf32>
    %c0_58 = arith.constant 0 : index
    %c0_59 = arith.constant 0 : index
    %97 = vector.load %arg8[%c0_58, %c0_59] : memref<32x2xf32, #tpu.memory_space<vmem>>, vector<32x2xf32>
    %98 = vector.broadcast %96 : vector<32x1xf32> to vector<32x2xf32>
    %99 = arith.mulf %97, %98 : vector<32x2xf32>
    %cst_60 = arith.constant dense<0.000000e+00> : vector<2xf32>
    %100 = vector.multi_reduction <add>, %99, %cst_60 [0] : vector<32x2xf32> to vector<2xf32>
    %101 = vector.shape_cast %100 : vector<2xf32> to vector<1x2xf32>
    %c0_61 = arith.constant 0 : index
    %c0_62 = arith.constant 0 : index
    %102 = vector.load %arg9[%c0_61, %c0_62] : memref<1x2xf32, #tpu.memory_space<vmem>>, vector<1x2xf32>
    %103 = arith.addf %101, %102 : vector<1x2xf32>
    %cst_63 = arith.constant 0.000000e+00 : f32
    %104 = vector.broadcast %cst_63 : f32 to vector<1x2xf32>
    %105 = arith.maximumf %103, %104 : vector<1x2xf32>
    %c0_64 = arith.constant 0 : index
    %c0_65 = arith.constant 0 : index
    %106 = vector.load %arg10[%c0_64, %c0_65] : memref<32x2xf32, #tpu.memory_space<vmem>>, vector<32x2xf32>
    %107 = vector.broadcast %105 : vector<1x2xf32> to vector<32x2xf32>
    %108 = arith.mulf %106, %107 : vector<32x2xf32>
    %cst_66 = arith.constant dense<0.000000e+00> : vector<32xf32>
    %109 = vector.multi_reduction <add>, %108, %cst_66 [1] : vector<32x2xf32> to vector<32xf32>
    %110 = vector.shape_cast %109 : vector<32xf32> to vector<32x1xf32>
    %c0_67 = arith.constant 0 : index
    %c0_68 = arith.constant 0 : index
    %111 = vector.load %arg11[%c0_67, %c0_68] : memref<32x1xf32, #tpu.memory_space<vmem>>, vector<32x1xf32>
    %112 = arith.addf %110, %111 : vector<32x1xf32>
    %cst_69 = arith.constant 0.000000e+00 : f32
    %113 = vector.broadcast %cst_69 : f32 to vector<32x1xf32>
    %114 = arith.subf %113, %112 : vector<32x1xf32>
    %115 = math.exp %114 : vector<32x1xf32>
    %cst_70 = arith.constant 1.000000e+00 : f32
    %116 = vector.broadcast %cst_70 : f32 to vector<32x1xf32>
    %117 = arith.addf %116, %115 : vector<32x1xf32>
    %118 = tpu.reciprocal %117 {approx = true} : vector<32x1xf32> -> vector<32x1xf32>
    %119 = vector.broadcast %118 : vector<32x1xf32> to vector<32x256xf32>
    %120 = arith.mulf %92, %119 : vector<32x256xf32>
    %121 = arith.addf %120, %26 : vector<32x256xf32>
    %cst_71 = arith.constant 0.000000e+00 : f32
    %122 = vector.broadcast %cst_71 : f32 to vector<32x256xf32>
    %123 = arith.maximumf %121, %122 : vector<32x256xf32>
    %c0_72 = arith.constant 0 : index
    %c0_73 = arith.constant 0 : index
    %c0_74 = arith.constant 0 : index
    %124 = vector.load %arg12[%c0_72, %c0_73, %c0_74] : memref<2x32x256xf32, #tpu.memory_space<vmem>>, vector<1x32x256xf32>
    %125 = vector.shape_cast %124 : vector<1x32x256xf32> to vector<32x256xf32>
    %126 = vector.shape_cast %123 : vector<32x256xf32> to vector<1x32x256xf32>
    tpu.vector_store %arg12[%c0_72, %c0_73, %c0_74], %126 {strides = array<i32>} : memref<2x32x256xf32, #tpu.memory_space<vmem>>, vector<1x32x256xf32>,
    %c1 = arith.constant 1 : index
    %c0_75 = arith.constant 0 : index
    %c0_76 = arith.constant 0 : index
    %127 = vector.load %arg1[%c1, %c0_75, %c0_76] : memref<2x32x256xf32, #tpu.memory_space<vmem>>, vector<1x32x256xf32>
    %128 = vector.shape_cast %127 : vector<1x32x256xf32> to vector<32x256xf32>
    %c0_77 = arith.constant 0 : index
    %c0_78 = arith.constant 0 : index
    %129 = vector.load %arg2[%c0_77, %c0_78] : memref<8x32xbf16, #tpu.memory_space<vmem>>, vector<8x32xbf16>
    %130 = arith.truncf %128 : vector<32x256xf32> to vector<32x256xbf16>
    %cst_79 = arith.constant dense<0.000000e+00> : vector<8x256xf32>
    %131 = tpu.matmul %129, %130, %cst_79 {dimension_numbers = #tpu.dot_dimension_numbers<[1], [0], [0], [1], [0, 0, 1, 1], [], []>} : vector<8x32xbf16>, vector<32x256xbf16>, vector<8x256xf32> -> vector<8x256xf32>
    %c0_80 = arith.constant 0 : index
    %c0_81 = arith.constant 0 : index
    %132 = vector.load %arg3[%c0_80, %c0_81] : memref<8x1xf32, #tpu.memory_space<vmem>>, vector<8x1xf32>
    %133 = vector.broadcast %132 : vector<8x1xf32> to vector<8x256xf32>
    %134 = arith.addf %131, %133 : vector<8x256xf32>
    %cst_82 = arith.constant 0.000000e+00 : f32
    %135 = vector.broadcast %cst_82 : f32 to vector<8x256xf32>
    %136 = arith.maximumf %134, %135 : vector<8x256xf32>
    %137 = arith.truncf %136 : vector<8x256xf32> to vector<8x256xbf16>
    %c0_83 = arith.constant 0 : index
    %c128_84 = arith.constant 128 : index
    %138 = vector.load %arg13[%c0_83, %c128_84] : memref<8x512xbf16, #tpu.memory_space<vmem>>, vector<8x256xbf16>
    tpu.vector_store %arg13[%c0_83, %c128_84], %137 {strides = array<i32>} : memref<8x512xbf16, #tpu.memory_space<vmem>>, vector<8x256xbf16>,
    %c0_85 = arith.constant 0 : index
    %c111_86 = arith.constant 111 : index
    %139 = vector.load %arg13[%c0_85, %c111_86] : memref<8x512xbf16, #tpu.memory_space<vmem>>, vector<8x256xbf16>
    %cst_87 = arith.constant 0.000000e+00 : bf16
    %140 = vector.broadcast %cst_87 : bf16 to vector<8x256xbf16>
    %141 = vector.shape_cast %22 : vector<1x256xi1> to vector<1x256xi1>
    %142 = vector.broadcast %141 : vector<1x256xi1> to vector<8x256xi1>
    %143 = arith.select %142, %139, %140 : vector<8x256xi1>, vector<8x256xbf16>
    %c0_88 = arith.constant 0 : index
    %c0_89 = arith.constant 0 : index
    %144 = vector.load %arg14[%c0_88, %c0_89] : memref<72x256xbf16, #tpu.memory_space<vmem>>, vector<8x256xbf16>
    tpu.vector_store %arg14[%c0_88, %c0_89], %143 {strides = array<i32>} : memref<72x256xbf16, #tpu.memory_space<vmem>>, vector<8x256xbf16>,
    %c0_90 = arith.constant 0 : index
    %c112_91 = arith.constant 112 : index
    %145 = vector.load %arg13[%c0_90, %c112_91] : memref<8x512xbf16, #tpu.memory_space<vmem>>, vector<8x256xbf16>
    %c8_92 = arith.constant 8 : index
    %c0_93 = arith.constant 0 : index
    %146 = vector.load %arg14[%c8_92, %c0_93] : memref<72x256xbf16, #tpu.memory_space<vmem>>, vector<8x256xbf16>
    tpu.vector_store %arg14[%c8_92, %c0_93], %145 {strides = array<i32>} : memref<72x256xbf16, #tpu.memory_space<vmem>>, vector<8x256xbf16>,
    %c0_94 = arith.constant 0 : index
    %c113_95 = arith.constant 113 : index
    %147 = vector.load %arg13[%c0_94, %c113_95] : memref<8x512xbf16, #tpu.memory_space<vmem>>, vector<8x256xbf16>
    %cst_96 = arith.constant 0.000000e+00 : bf16
    %148 = vector.broadcast %cst_96 : bf16 to vector<8x256xbf16>
    %149 = vector.shape_cast %24 : vector<1x256xi1> to vector<1x256xi1>
    %150 = vector.broadcast %149 : vector<1x256xi1> to vector<8x256xi1>
    %151 = arith.select %150, %147, %148 : vector<8x256xi1>, vector<8x256xbf16>
    %c16_97 = arith.constant 16 : index
    %c0_98 = arith.constant 0 : index
    %152 = vector.load %arg14[%c16_97, %c0_98] : memref<72x256xbf16, #tpu.memory_space<vmem>>, vector<8x256xbf16>
    tpu.vector_store %arg14[%c16_97, %c0_98], %151 {strides = array<i32>} : memref<72x256xbf16, #tpu.memory_space<vmem>>, vector<8x256xbf16>,
    %c0_99 = arith.constant 0 : index
    %c127_100 = arith.constant 127 : index
    %153 = vector.load %arg13[%c0_99, %c127_100] : memref<8x512xbf16, #tpu.memory_space<vmem>>, vector<8x256xbf16>
    %cst_101 = arith.constant 0.000000e+00 : bf16
    %154 = vector.broadcast %cst_101 : bf16 to vector<8x256xbf16>
    %155 = vector.shape_cast %22 : vector<1x256xi1> to vector<1x256xi1>
    %156 = vector.broadcast %155 : vector<1x256xi1> to vector<8x256xi1>
    %157 = arith.select %156, %153, %154 : vector<8x256xi1>, vector<8x256xbf16>
    %c24_102 = arith.constant 24 : index
    %c0_103 = arith.constant 0 : index
    %158 = vector.load %arg14[%c24_102, %c0_103] : memref<72x256xbf16, #tpu.memory_space<vmem>>, vector<8x256xbf16>
    tpu.vector_store %arg14[%c24_102, %c0_103], %157 {strides = array<i32>} : memref<72x256xbf16, #tpu.memory_space<vmem>>, vector<8x256xbf16>,
    %c0_104 = arith.constant 0 : index
    %c128_105 = arith.constant 128 : index
    %159 = vector.load %arg13[%c0_104, %c128_105] : memref<8x512xbf16, #tpu.memory_space<vmem>>, vector<8x256xbf16>
    %c32_106 = arith.constant 32 : index
    %c0_107 = arith.constant 0 : index
    %160 = vector.load %arg14[%c32_106, %c0_107] : memref<72x256xbf16, #tpu.memory_space<vmem>>, vector<8x256xbf16>
    tpu.vector_store %arg14[%c32_106, %c0_107], %159 {strides = array<i32>} : memref<72x256xbf16, #tpu.memory_space<vmem>>, vector<8x256xbf16>,
    %c0_108 = arith.constant 0 : index
    %c129_109 = arith.constant 129 : index
    %161 = vector.load %arg13[%c0_108, %c129_109] : memref<8x512xbf16, #tpu.memory_space<vmem>>, vector<8x256xbf16>
    %cst_110 = arith.constant 0.000000e+00 : bf16
    %162 = vector.broadcast %cst_110 : bf16 to vector<8x256xbf16>
    %163 = vector.shape_cast %24 : vector<1x256xi1> to vector<1x256xi1>
    %164 = vector.broadcast %163 : vector<1x256xi1> to vector<8x256xi1>
    %165 = arith.select %164, %161, %162 : vector<8x256xi1>, vector<8x256xbf16>
    %c40_111 = arith.constant 40 : index
    %c0_112 = arith.constant 0 : index
    %166 = vector.load %arg14[%c40_111, %c0_112] : memref<72x256xbf16, #tpu.memory_space<vmem>>, vector<8x256xbf16>
    tpu.vector_store %arg14[%c40_111, %c0_112], %165 {strides = array<i32>} : memref<72x256xbf16, #tpu.memory_space<vmem>>, vector<8x256xbf16>,
    %c0_113 = arith.constant 0 : index
    %c143_114 = arith.constant 143 : index
    %167 = vector.load %arg13[%c0_113, %c143_114] : memref<8x512xbf16, #tpu.memory_space<vmem>>, vector<8x256xbf16>
    %cst_115 = arith.constant 0.000000e+00 : bf16
    %168 = vector.broadcast %cst_115 : bf16 to vector<8x256xbf16>
    %169 = vector.shape_cast %22 : vector<1x256xi1> to vector<1x256xi1>
    %170 = vector.broadcast %169 : vector<1x256xi1> to vector<8x256xi1>
    %171 = arith.select %170, %167, %168 : vector<8x256xi1>, vector<8x256xbf16>
    %c48_116 = arith.constant 48 : index
    %c0_117 = arith.constant 0 : index
    %172 = vector.load %arg14[%c48_116, %c0_117] : memref<72x256xbf16, #tpu.memory_space<vmem>>, vector<8x256xbf16>
    tpu.vector_store %arg14[%c48_116, %c0_117], %171 {strides = array<i32>} : memref<72x256xbf16, #tpu.memory_space<vmem>>, vector<8x256xbf16>,
    %c0_118 = arith.constant 0 : index
    %c144_119 = arith.constant 144 : index
    %173 = vector.load %arg13[%c0_118, %c144_119] : memref<8x512xbf16, #tpu.memory_space<vmem>>, vector<8x256xbf16>
    %c56_120 = arith.constant 56 : index
    %c0_121 = arith.constant 0 : index
    %174 = vector.load %arg14[%c56_120, %c0_121] : memref<72x256xbf16, #tpu.memory_space<vmem>>, vector<8x256xbf16>
    tpu.vector_store %arg14[%c56_120, %c0_121], %173 {strides = array<i32>} : memref<72x256xbf16, #tpu.memory_space<vmem>>, vector<8x256xbf16>,
    %c0_122 = arith.constant 0 : index
    %c145_123 = arith.constant 145 : index
    %175 = vector.load %arg13[%c0_122, %c145_123] : memref<8x512xbf16, #tpu.memory_space<vmem>>, vector<8x256xbf16>
    %cst_124 = arith.constant 0.000000e+00 : bf16
    %176 = vector.broadcast %cst_124 : bf16 to vector<8x256xbf16>
    %177 = vector.shape_cast %24 : vector<1x256xi1> to vector<1x256xi1>
    %178 = vector.broadcast %177 : vector<1x256xi1> to vector<8x256xi1>
    %179 = arith.select %178, %175, %176 : vector<8x256xi1>, vector<8x256xbf16>
    %c64_125 = arith.constant 64 : index
    %c0_126 = arith.constant 0 : index
    %180 = vector.load %arg14[%c64_125, %c0_126] : memref<72x256xbf16, #tpu.memory_space<vmem>>, vector<8x256xbf16>
    tpu.vector_store %arg14[%c64_125, %c0_126], %179 {strides = array<i32>} : memref<72x256xbf16, #tpu.memory_space<vmem>>, vector<8x256xbf16>,
    %c0_127 = arith.constant 0 : index
    %c0_128 = arith.constant 0 : index
    %181 = vector.load %arg4[%c0_127, %c0_128] : memref<8x72xbf16, #tpu.memory_space<vmem>>, vector<8x72xbf16>
    %c0_129 = arith.constant 0 : index
    %c0_130 = arith.constant 0 : index
    %182 = vector.load %arg14[%c0_129, %c0_130] : memref<72x256xbf16, #tpu.memory_space<vmem>>, vector<72x256xbf16>
    %cst_131 = arith.constant dense<0.000000e+00> : vector<8x256xf32>
    %183 = tpu.matmul %181, %182, %cst_131 {dimension_numbers = #tpu.dot_dimension_numbers<[1], [0], [0], [1], [0, 0, 1, 1], [], []>} : vector<8x72xbf16>, vector<72x256xbf16>, vector<8x256xf32> -> vector<8x256xf32>
    %c0_132 = arith.constant 0 : index
    %c0_133 = arith.constant 0 : index
    %184 = vector.load %arg5[%c0_132, %c0_133] : memref<8x1xf32, #tpu.memory_space<vmem>>, vector<8x1xf32>
    %185 = vector.broadcast %184 : vector<8x1xf32> to vector<8x256xf32>
    %186 = arith.addf %183, %185 : vector<8x256xf32>
    %cst_134 = arith.constant 0.000000e+00 : f32
    %187 = vector.broadcast %cst_134 : f32 to vector<8x256xf32>
    %188 = arith.maximumf %186, %187 : vector<8x256xf32>
    %c0_135 = arith.constant 0 : index
    %c0_136 = arith.constant 0 : index
    %189 = vector.load %arg6[%c0_135, %c0_136] : memref<32x8xbf16, #tpu.memory_space<vmem>>, vector<32x8xbf16>
    %190 = arith.truncf %188 : vector<8x256xf32> to vector<8x256xbf16>
    %cst_137 = arith.constant dense<0.000000e+00> : vector<32x256xf32>
    %191 = tpu.matmul %189, %190, %cst_137 {dimension_numbers = #tpu.dot_dimension_numbers<[1], [0], [0], [1], [0, 0, 1, 1], [], []>} : vector<32x8xbf16>, vector<8x256xbf16>, vector<32x256xf32> -> vector<32x256xf32>
    %c0_138 = arith.constant 0 : index
    %c0_139 = arith.constant 0 : index
    %192 = vector.load %arg7[%c0_138, %c0_139] : memref<32x1xf32, #tpu.memory_space<vmem>>, vector<32x1xf32>
    %193 = vector.broadcast %192 : vector<32x1xf32> to vector<32x256xf32>
    %194 = arith.addf %191, %193 : vector<32x256xf32>
    %cst_140 = arith.constant dense<0.000000e+00> : vector<32xf32>
    %195 = vector.multi_reduction <add>, %194, %cst_140 [1] : vector<32x256xf32> to vector<32xf32>
    %196 = vector.shape_cast %195 : vector<32xf32> to vector<32x1xf32>
    %cst_141 = arith.constant 3.906250e-03 : f32
    %197 = vector.broadcast %cst_141 : f32 to vector<32x1xf32>
    %198 = arith.mulf %196, %197 : vector<32x1xf32>
    %c0_142 = arith.constant 0 : index
    %c0_143 = arith.constant 0 : index
    %199 = vector.load %arg8[%c0_142, %c0_143] : memref<32x2xf32, #tpu.memory_space<vmem>>, vector<32x2xf32>
    %200 = vector.broadcast %198 : vector<32x1xf32> to vector<32x2xf32>
    %201 = arith.mulf %199, %200 : vector<32x2xf32>
    %cst_144 = arith.constant dense<0.000000e+00> : vector<2xf32>
    %202 = vector.multi_reduction <add>, %201, %cst_144 [0] : vector<32x2xf32> to vector<2xf32>
    %203 = vector.shape_cast %202 : vector<2xf32> to vector<1x2xf32>
    %c0_145 = arith.constant 0 : index
    %c0_146 = arith.constant 0 : index
    %204 = vector.load %arg9[%c0_145, %c0_146] : memref<1x2xf32, #tpu.memory_space<vmem>>, vector<1x2xf32>
    %205 = arith.addf %203, %204 : vector<1x2xf32>
    %cst_147 = arith.constant 0.000000e+00 : f32
    %206 = vector.broadcast %cst_147 : f32 to vector<1x2xf32>
    %207 = arith.maximumf %205, %206 : vector<1x2xf32>
    %c0_148 = arith.constant 0 : index
    %c0_149 = arith.constant 0 : index
    %208 = vector.load %arg10[%c0_148, %c0_149] : memref<32x2xf32, #tpu.memory_space<vmem>>, vector<32x2xf32>
    %209 = vector.broadcast %207 : vector<1x2xf32> to vector<32x2xf32>
    %210 = arith.mulf %208, %209 : vector<32x2xf32>
    %cst_150 = arith.constant dense<0.000000e+00> : vector<32xf32>
    %211 = vector.multi_reduction <add>, %210, %cst_150 [1] : vector<32x2xf32> to vector<32xf32>
    %212 = vector.shape_cast %211 : vector<32xf32> to vector<32x1xf32>
    %c0_151 = arith.constant 0 : index
    %c0_152 = arith.constant 0 : index
    %213 = vector.load %arg11[%c0_151, %c0_152] : memref<32x1xf32, #tpu.memory_space<vmem>>, vector<32x1xf32>
    %214 = arith.addf %212, %213 : vector<32x1xf32>
    %cst_153 = arith.constant 0.000000e+00 : f32
    %215 = vector.broadcast %cst_153 : f32 to vector<32x1xf32>
    %216 = arith.subf %215, %214 : vector<32x1xf32>
    %217 = math.exp %216 : vector<32x1xf32>
    %cst_154 = arith.constant 1.000000e+00 : f32
    %218 = vector.broadcast %cst_154 : f32 to vector<32x1xf32>
    %219 = arith.addf %218, %217 : vector<32x1xf32>
    %220 = tpu.reciprocal %219 {approx = true} : vector<32x1xf32> -> vector<32x1xf32>
    %221 = vector.broadcast %220 : vector<32x1xf32> to vector<32x256xf32>
    %222 = arith.mulf %194, %221 : vector<32x256xf32>
    %223 = arith.addf %222, %128 : vector<32x256xf32>
    %cst_155 = arith.constant 0.000000e+00 : f32
    %224 = vector.broadcast %cst_155 : f32 to vector<32x256xf32>
    %225 = arith.maximumf %223, %224 : vector<32x256xf32>
    %c1_156 = arith.constant 1 : index
    %c0_157 = arith.constant 0 : index
    %c0_158 = arith.constant 0 : index
    %226 = vector.load %arg12[%c1_156, %c0_157, %c0_158] : memref<2x32x256xf32, #tpu.memory_space<vmem>>, vector<1x32x256xf32>
    %227 = vector.shape_cast %226 : vector<1x32x256xf32> to vector<32x256xf32>
    %228 = vector.shape_cast %225 : vector<32x256xf32> to vector<1x32x256xf32>
    tpu.vector_store %arg12[%c1_156, %c0_157, %c0_158], %228 {strides = array<i32>} : memref<2x32x256xf32, #tpu.memory_space<vmem>>, vector<1x32x256xf32>,
    return
  }
  func.func @transform_0(%arg0: i32) -> (i32, i32, i32) {
    %c0_i32 = arith.constant 0 : i32
    %c0_i32_0 = arith.constant 0 : i32
    %c0_i32_1 = arith.constant 0 : i32
    return %arg0, %c0_i32, %c0_i32_0 : i32, i32, i32
  }
  func.func @transform_1(%arg0: i32) -> (i32, i32) {
    %c0_i32 = arith.constant 0 : i32
    %c0_i32_0 = arith.constant 0 : i32
    %c0_i32_1 = arith.constant 0 : i32
    return %c0_i32, %c0_i32_0 : i32, i32
  }
  func.func @transform_2(%arg0: i32) -> (i32, i32) {
    %c0_i32 = arith.constant 0 : i32
    %c0_i32_0 = arith.constant 0 : i32
    %c0_i32_1 = arith.constant 0 : i32
    return %c0_i32, %c0_i32_0 : i32, i32
  }
  func.func @transform_3(%arg0: i32) -> (i32, i32) {
    %c0_i32 = arith.constant 0 : i32
    %c0_i32_0 = arith.constant 0 : i32
    %c0_i32_1 = arith.constant 0 : i32
    return %c0_i32, %c0_i32_0 : i32, i32
  }
  func.func @transform_4(%arg0: i32) -> (i32, i32) {
    %c0_i32 = arith.constant 0 : i32
    %c0_i32_0 = arith.constant 0 : i32
    %c0_i32_1 = arith.constant 0 : i32
    return %c0_i32, %c0_i32_0 : i32, i32
  }
  func.func @transform_5(%arg0: i32) -> (i32, i32) {
    %c0_i32 = arith.constant 0 : i32
    %c0_i32_0 = arith.constant 0 : i32
    %c0_i32_1 = arith.constant 0 : i32
    return %c0_i32, %c0_i32_0 : i32, i32
  }
  func.func @transform_6(%arg0: i32) -> (i32, i32) {
    %c0_i32 = arith.constant 0 : i32
    %c0_i32_0 = arith.constant 0 : i32
    %c0_i32_1 = arith.constant 0 : i32
    return %c0_i32, %c0_i32_0 : i32, i32
  }
  func.func @transform_7(%arg0: i32) -> (i32, i32) {
    %c0_i32 = arith.constant 0 : i32
    %c0_i32_0 = arith.constant 0 : i32
    %c0_i32_1 = arith.constant 0 : i32
    return %c0_i32, %c0_i32_0 : i32, i32
  }
  func.func @transform_8(%arg0: i32) -> (i32, i32) {
    %c0_i32 = arith.constant 0 : i32
    %c0_i32_0 = arith.constant 0 : i32
    %c0_i32_1 = arith.constant 0 : i32
    return %c0_i32, %c0_i32_0 : i32, i32
  }
  func.func @transform_9(%arg0: i32) -> (i32, i32) {
    %c0_i32 = arith.constant 0 : i32
    %c0_i32_0 = arith.constant 0 : i32
    %c0_i32_1 = arith.constant 0 : i32
    return %c0_i32, %c0_i32_0 : i32, i32
  }
  func.func @transform_10(%arg0: i32) -> (i32, i32) {
    %c0_i32 = arith.constant 0 : i32
    %c0_i32_0 = arith.constant 0 : i32
    %c0_i32_1 = arith.constant 0 : i32
    return %c0_i32, %c0_i32_0 : i32, i32
  }
  func.func @transform_11(%arg0: i32) -> (i32, i32, i32) {
    %c0_i32 = arith.constant 0 : i32
    %c0_i32_0 = arith.constant 0 : i32
    %c0_i32_1 = arith.constant 0 : i32
    return %arg0, %c0_i32, %c0_i32_0 : i32, i32, i32
  }
}

</mosaic_0001>

<llo_original>
// kernel: tpu_custom_call.1
$region0: #{tpu_custom_call.1}
  #allocation0 [shape = 'u32[]', space=smem, size = 0x4, offset = 0x4, fixed_abs, tag = 'smem constant byte address 0x4 - core index']
  #allocation1 [shape = 'u32[72,128]{1,0:T(1,128)}', space=vmem, size = 0x9000, scoped, tag = 'internal scratch']
  #allocation2 [shape = 'bf16[8,512]{1,0:T(8,128)(2,1)}', space=vmem, size = 0x2000, scoped, tag = 'scratch operand']
  #allocation3 [shape = 'bf16[72,256]{1,0:T(8,128)(2,1)}', space=vmem, size = 0x9000, scoped, tag = 'scratch operand']
  %s0 = inlined_call_operand.hbm [shape: f32[2,32,256], index: 0, kind: input, shape index: {}]
  %s1 = inlined_call_operand.vmem [shape: bf16[8,32], index: 1, kind: input, shape index: {}]
  %s2 = inlined_call_operand.vmem [shape: f32[8,1], index: 2, kind: input, shape index: {}]
  %s3 = inlined_call_operand.vmem [shape: bf16[8,72], index: 3, kind: input, shape index: {}]
  %s4 = inlined_call_operand.vmem [shape: f32[8,1], index: 4, kind: input, shape index: {}]
  %s5 = inlined_call_operand.vmem [shape: bf16[32,8], index: 5, kind: input, shape index: {}]
  %s6 = inlined_call_operand.vmem [shape: f32[32,1], index: 6, kind: input, shape index: {}]
  %s7 = inlined_call_operand.vmem [shape: f32[32,2], index: 7, kind: input, shape index: {}]
  %s8 = inlined_call_operand.vmem [shape: f32[1,2], index: 8, kind: input, shape index: {}]
  %s9 = inlined_call_operand.vmem [shape: f32[32,2], index: 9, kind: input, shape index: {}]
  %s10 = inlined_call_operand.vmem [shape: f32[32,1], index: 10, kind: input, shape index: {}]
  %s11 = inlined_call_operand.hbm [shape: f32[2,32,256], index: 11, kind: output, shape index: {}]
  %s12 = sld [smem:[#allocation0]]
  $region58: #{tpu_custom_call.1} parent=0
    _
  %s14 = ssub.s32 1, %s12
  %s15 = scalar_select 0, %s14, %s12
  $region1: #{tpu_custom_call.1} parent=0
    #allocation4 [shape = 'u8[65536]{0}', space=vmem, size = 0x10000, scoped, tag = 'input window, operand 0, single buffered']
    #allocation5 [shape = 's32[1]{0}', space=sflag, size = 0x4, scoped, tag = 'scoped memory for tpu_custom_call.1']
    #allocation6 [shape = 's32[1]{0}', space=sflag, size = 0x4, scoped, tag = 'scoped memory for tpu_custom_call.1']
    #allocation7 [shape = 'u8[65536]{0}', space=vmem, size = 0x10000, scoped, tag = 'output window, operand 0, single buffered']
    %16 = vsyncpa [#allocation5], 0
    %17 = vsyncpa [#allocation6], 0
    // Predicated region
    $region2: #{tpu_custom_call.1} parent=1 // pred_check
      _
    $region3: #{tpu_custom_call.1} parent=1 // pred_check_branch
      %19 = sbr.rel (0) target = $region5
    $region4: #{tpu_custom_call.1} parent=1 // pred_region
      %21 = vsyncadd [#allocation5], 0
      %s22 = sshll.u32 %s0, 4
      %s23 = int_to_ptr.hbm [resolvable:$true] %s22
      %s24 = sshll.u32 [#allocation4], 4
      %s25 = int_to_ptr.vmem [resolvable:$true] %s24
      %30 = dma.hbm_to_vmem [thread:$0]  %s23, 2048, %s25, [#allocation5], 256, 256, 16
    $region5: #{tpu_custom_call.1} parent=1 // pred_fallthru
      _
    // Predicated region
    $region6: #{tpu_custom_call.1} parent=1 // pred_check
      _
    $region7: #{tpu_custom_call.1} parent=1 // pred_check_branch
      %32 = sbr.rel (0) target = $region9
    $region8: #{tpu_custom_call.1} parent=1 // pred_region
      _
    $region9: #{tpu_custom_call.1} parent=1 // pred_fallthru
      _
    // Predicated region
    $region10: #{tpu_custom_call.1} parent=1 // pred_check
      _
    $region11: #{tpu_custom_call.1} parent=1 // pred_check_branch
      %34 = sbr.rel (0) target = $region13
    $region12: #{tpu_custom_call.1} parent=1 // pred_region
      _
    $region13: #{tpu_custom_call.1} parent=1 // pred_fallthru
      _
    // Predicated region
    $region14: #{tpu_custom_call.1} parent=1 // pred_check
      _
    $region15: #{tpu_custom_call.1} parent=1 // pred_check_branch
      %36 = sbr.rel (0) target = $region17
    $region16: #{tpu_custom_call.1} parent=1 // pred_region
      _
    $region17: #{tpu_custom_call.1} parent=1 // pred_fallthru
      _
    // Predicated region
    $region18: #{tpu_custom_call.1} parent=1 // pred_check
      _
    $region19: #{tpu_custom_call.1} parent=1 // pred_check_branch
      %38 = sbr.rel (0) target = $region21
    $region20: #{tpu_custom_call.1} parent=1 // pred_region
      _
    $region21: #{tpu_custom_call.1} parent=1 // pred_fallthru
      _
    // Predicated region
    $region22: #{tpu_custom_call.1} parent=1 // pred_check
      _
    $region23: #{tpu_custom_call.1} parent=1 // pred_check_branch
      %40 = sbr.rel (0) target = $region25
    $region24: #{tpu_custom_call.1} parent=1 // pred_region
      _
    $region25: #{tpu_custom_call.1} parent=1 // pred_fallthru
      _
    // Predicated region
    $region26: #{tpu_custom_call.1} parent=1 // pred_check
      _
    $region27: #{tpu_custom_call.1} parent=1 // pred_check_branch
      %42 = sbr.rel (0) target = $region29
    $region28: #{tpu_custom_call.1} parent=1 // pred_region
      _
    $region29: #{tpu_custom_call.1} parent=1 // pred_fallthru
      _
    // Predicated region
    $region30: #{tpu_custom_call.1} parent=1 // pred_check
      _
    $region31: #{tpu_custom_call.1} parent=1 // pred_check_branch
      %44 = sbr.rel (0) target = $region33
    $region32: #{tpu_custom_call.1} parent=1 // pred_region
      _
    $region33: #{tpu_custom_call.1} parent=1 // pred_fallthru
      _
    // Predicated region
    $region34: #{tpu_custom_call.1} parent=1 // pred_check
      _
    $region35: #{tpu_custom_call.1} parent=1 // pred_check_branch
      %46 = sbr.rel (0) target = $region37
    $region36: #{tpu_custom_call.1} parent=1 // pred_region
      _
    $region37: #{tpu_custom_call.1} parent=1 // pred_fallthru
      _
    // Predicated region
    $region38: #{tpu_custom_call.1} parent=1 // pred_check
      _
    $region39: #{tpu_custom_call.1} parent=1 // pred_check_branch
      %48 = sbr.rel (0) target = $region41
    $region40: #{tpu_custom_call.1} parent=1 // pred_region
      _
    $region41: #{tpu_custom_call.1} parent=1 // pred_fallthru
      _
    // Predicated region
    $region42: #{tpu_custom_call.1} parent=1 // pred_check
      _
    $region43: #{tpu_custom_call.1} parent=1 // pred_check_branch
      %50 = sbr.rel (0) target = $region45
    $region44: #{tpu_custom_call.1} parent=1 // pred_region
      _
    $region45: #{tpu_custom_call.1} parent=1 // pred_fallthru
      _
    // Predicated region
    $region46: #{tpu_custom_call.1} parent=1 // pred_check
      _
    $region47: #{tpu_custom_call.1} parent=1 // pred_check_branch
      %52 = sbr.rel (0) target = $region49
    $region48: #{tpu_custom_call.1} parent=1 // pred_region
      %54 = dma.done [#allocation5], 2048
    $region49: #{tpu_custom_call.1} parent=1 // pred_fallthru
      _
    %58 = vst [vmem:[#allocation2] sm:$0xf] 0
    %59 = vst [vmem:[#allocation2 + $0xc] sm:$0xf] 0
    %v60 = vlaneseq
    %v61 = vand.u32 %v60, 127
    %v62 = vadd.s32 %v61, 128
    %vm63 = vcmp.lt.s32.totalorder %v61, 0
    %v64 = vsub.s32 0, %v61
    %v65 = vsel %vm63, %v64, %v61
    %v66 = vshrl.u32 %v65, 4
    %v67 = vand.u32 %v65, 15
    %v68 = vsub.s32 0, %v67
    %v69 = vsel %vm63, %v68, %v67
    %vm70 = vcmp.lt.s32.totalorder %v62, 0
    %v71 = vsub.s32 0, %v62
    %v72 = vsel %vm70, %v71, %v62
    %v73 = vshrl.u32 %v72, 4
    %v74 = vand.u32 %v72, 15
    %v75 = vsub.s32 0, %v74
    %v76 = vsel %vm70, %v75, %v74
    %vm77 = vcmp.ne.s32.totalorder %v69, 0
    %vm78 = vcmp.ne.s32.totalorder %v76, 0
    %vm79 = vcmp.lt.s32.totalorder %v69, 0
    %vm80 = vcmp.lt.s32.totalorder %v76, 0
    %vm81 = vmand %vm79, %vm77
    %vm82 = vmand %vm80, %vm78
    %v83 = vadd.s32 %v69, 16
    %v84 = vadd.s32 %v76, 16
    %v85 = vsel %vm81, %v83, %v69
    %v86 = vsel %vm82, %v84, %v76
    %vm87 = vcmp.ne.s32.totalorder %v85, 0
    %vm88 = vcmp.ne.s32.totalorder %v86, 0
    %vm89 = vcmp.ne.s32.totalorder %v85, 15
    %vm90 = vcmp.ne.s32.totalorder %v86, 15
    %v91 = vld [vmem:[#allocation4] sm:$0xff]
    %v92 = vld [vmem:[#allocation4 + $0x8] sm:$0xff]
    %v93 = vld [vmem:[#allocation4 + $0x10] sm:$0xff]
    %v94 = vld [vmem:[#allocation4 + $0x18] sm:$0xff]
    %v95 = vld [vmem:[#allocation4 + $0x20] sm:$0xff]
    %v96 = vld [vmem:[#allocation4 + $0x28] sm:$0xff]
    %v97 = vld [vmem:[#allocation4 + $0x30] sm:$0xff]
    %v98 = vld [vmem:[#allocation4 + $0x38] sm:$0xff]
    %v99 = vld [vmem:[%s1] sm:$0xf]
    %v100 = vpack.c.bf16 %v93, %v91
    %v101 = vpack.c.bf16 %v94, %v92
    %v102 = vpack.c.bf16 %v97, %v95
    %v103 = vpack.c.bf16 %v98, %v96
    %v104 = vld [vmem:[%s2] sm:$0xff]
    %106 = vset.pattern.permute.xlu0 0
    %107 = vperm.xlu0 %106, %v104
    %v108 = vpop.permute.xlu0 %107
    %vm110 = vcmask 261120
    %v112 = vsel %vm110, %v99, 0
    %114 = vmatpush.bf16.msra.mxu0 0
    %115 = vmatpush.bf16.msra.mxu0 0
    %116 = vmatpush.bf16.msra.mxu0 0
    %117 = vmatpush.bf16.msra.mxu0 0
    %118 = vmatpush.bf16.msra.mxu0 0
    %119 = vmatpush.bf16.msra.mxu0 0
    %120 = vmatpush.bf16.msra.mxu0 %v102
    %121 = vmatpush.bf16.msra.mxu0 %v100
    %122 = vmatmul.bf16.gmra.mxu0 %v112
    %v123 = vpop.f32.mrf.mxu0
    %v124 = vadd.f32 %v108, %v123
    %v125 = vpop.f32.mrf.mxu0
    %126 = vdwg.mxu0
    %127 = vmatpush.bf16.msra.mxu0 0
    %128 = vmatpush.bf16.msra.mxu0 0
    %129 = vmatpush.bf16.msra.mxu0 0
    %130 = vmatpush.bf16.msra.mxu0 0
    %131 = vmatpush.bf16.msra.mxu0 0
    %132 = vmatpush.bf16.msra.mxu0 0
    %133 = vmatpush.bf16.msra.mxu0 %v103
    %134 = vmatpush.bf16.msra.mxu0 %v101
    %135 = vmatmul.bf16.gmra.mxu0 %v112
    %v136 = vpop.f32.mrf.mxu0
    %v137 = vadd.f32 %v108, %v136
    %v138 = vpop.f32.mrf.mxu0
    %139 = vdwg.mxu0
    %v140 = vmax.f32 %v124, 0.0
    %v141 = vmax.f32 %v137, 0.0
    %v142 = vpack.c.bf16 %v141, %v140
    %143 = vst [vmem:[#allocation2 + $0x4] sm:$0xff] %v142
    %v144 = vld [vmem:[#allocation2] sm:$0xff]
    %v145 = vld [vmem:[#allocation2 + $0x8] sm:$0xf]
    %v146 = vsel %vm87, 1, 0
    %v147 = vsel %vm88, 1, 0
    %vm148 = vcmp.eq.s32.totalorder %v146, 1
    %vm149 = vcmp.eq.s32.totalorder %v147, 1
    %vm150 = vmpackc.low %vm149, %vm148
    %v151 = vsel %vm150, 65537, 0
    %152 = vrot.lane.b32.xlu0 %v151, 111
    %v153 = vpop.permute.xlu0 %152
    %v154 = vrot.slane %v153, 4
    %vm155 = vcmask 908288
    %v156 = vsel %vm155, %v154, %v153
    %v157 = vunpack.c.l.b16 %v156
    %v158 = vunpack.c.h.b16 %v156
    %v159 = vunpack.c.l.b16 0
    %v160 = vunpack.c.h.b16 0
    %vm161 = vcmp.ne.s32.totalorder %v157, %v159
    %vm162 = vcmp.ne.s32.totalorder %v158, %v160
    %vm163 = vmpackc.low %vm162, %vm161
    %v164 = vunpack.c.l.b16 %v154
    %v165 = vunpack.c.h.b16 %v154
    %v166 = vunpack.c.l.b16 0
    %v167 = vunpack.c.h.b16 0
    %vm168 = vcmp.ne.s32.totalorder %v164, %v166
    %vm169 = vcmp.ne.s32.totalorder %v165, %v167
    %vm170 = vmpackc.low %vm169, %vm168
    %v171 = vsel %vm163, %v144, 0
    %v172 = vsel %vm170, %v145, 0
    %175 = vrot.lane.b32.xlu0 %v171, 17
    %v176 = vpop.permute.xlu0 %175
    %177 = vrot.lane.b32.xlu0 %v172, 17
    %v178 = vpop.permute.xlu0 %177
    %v179 = vrot.slane %v176, 4
    %v180 = vrot.slane %v178, 4
    %vm181 = vcmask 1043456
    %v182 = vsel %vm181, %v179, %v180
    %vm183 = vcmask 138240
    %v184 = vsel %vm183, %v176, %v182
    %186 = vst [vmem:[#allocation3] sm:$0xff] %v184
    %v187 = vld [vmem:[#allocation2] sm:$0xff]
    %v188 = vld [vmem:[#allocation2 + $0x8] sm:$0xf]
    %191 = vrot.lane.b32.xlu0 %v187, 16
    %v192 = vpop.permute.xlu0 %191
    %193 = vrot.lane.b32.xlu0 %v188, 16
    %v194 = vpop.permute.xlu0 %193
    %v195 = vrot.slane %v192, 4
    %v196 = vrot.slane %v194, 4
    %v197 = vsel %vm181, %v195, %v196
    %vm198 = vcmask 130048
    %v199 = vsel %vm198, %v192, %v197
    %201 = vst [vmem:[#allocation3 + $0x8] sm:$0xff] %v199
    %v202 = vld [vmem:[#allocation2] sm:$0xff]
    %v203 = vld [vmem:[#allocation2 + $0x8] sm:$0xf]
    %v204 = vsel %vm89, 1, 0
    %v205 = vsel %vm90, 1, 0
    %vm206 = vcmp.eq.s32.totalorder %v204, 1
    %vm207 = vcmp.eq.s32.totalorder %v205, 1
    %vm208 = vmpackc.low %vm207, %vm206
    %v209 = vsel %vm208, 65537, 0
    %210 = vrot.lane.b32.xlu0 %v209, 113
    %v211 = vpop.permute.xlu0 %210
    %v212 = vrot.slane %v211, 4
    %vm213 = vcmask 924672
    %v214 = vsel %vm213, %v212, %v211
    %v215 = vunpack.c.l.b16 %v214
    %v216 = vunpack.c.h.b16 %v214
    %v217 = vunpack.c.l.b16 0
    %v218 = vunpack.c.h.b16 0
    %vm219 = vcmp.ne.s32.totalorder %v215, %v217
    %vm220 = vcmp.ne.s32.totalorder %v216, %v218
    %vm221 = vmpackc.low %vm220, %vm219
    %v222 = vunpack.c.l.b16 %v212
    %v223 = vunpack.c.h.b16 %v212
    %v224 = vunpack.c.l.b16 0
    %v225 = vunpack.c.h.b16 0
    %vm226 = vcmp.ne.s32.totalorder %v222, %v224
    %vm227 = vcmp.ne.s32.totalorder %v223, %v225
    %vm228 = vmpackc.low %vm227, %vm226
    %v229 = vsel %vm221, %v202, 0
    %v230 = vsel %vm228, %v203, 0
    %233 = vrot.lane.b32.xlu0 %v229, 15
    %v234 = vpop.permute.xlu0 %233
    %235 = vrot.lane.b32.xlu0 %v230, 15
    %v236 = vpop.permute.xlu0 %235
    %v237 = vrot.slane %v234, 4
    %v238 = vrot.slane %v236, 4
    %v239 = vsel %vm181, %v237, %v238
    %vm240 = vcmask 121856
    %v241 = vsel %vm240, %v234, %v239
    %243 = vst [vmem:[#allocation3 + $0x10] sm:$0xff] %v241
    %v244 = vld [vmem:[#allocation2] sm:$0xff]
    %v245 = vld [vmem:[#allocation2 + $0x8] sm:$0xf]
    %246 = vrot.lane.b32.xlu0 %v151, 127
    %v247 = vpop.permute.xlu0 %246
    %v248 = vrot.slane %v247, 4
    %vm249 = vcmask 1039360
    %v250 = vsel %vm249, %v248, %v247
    %v251 = vunpack.c.l.b16 %v250
    %v252 = vunpack.c.h.b16 %v250
    %v253 = vunpack.c.l.b16 0
    %v254 = vunpack.c.h.b16 0
    %vm255 = vcmp.ne.s32.totalorder %v251, %v253
    %vm256 = vcmp.ne.s32.totalorder %v252, %v254
    %vm257 = vmpackc.low %vm256, %vm255
    %v258 = vunpack.c.l.b16 %v248
    %v259 = vunpack.c.h.b16 %v248
    %v260 = vunpack.c.l.b16 0
    %v261 = vunpack.c.h.b16 0
    %vm262 = vcmp.ne.s32.totalorder %v258, %v260
    %vm263 = vcmp.ne.s32.totalorder %v259, %v261
    %vm264 = vmpackc.low %vm263, %vm262
    %v265 = vsel %vm257, %v244, 0
    %v266 = vsel %vm264, %v245, 0
    %269 = vrot.lane.b32.xlu0 %v265, 1
    %v270 = vpop.permute.xlu0 %269
    %271 = vrot.lane.b32.xlu0 %v266, 1
    %v272 = vpop.permute.xlu0 %271
    %v273 = vrot.slane %v270, 4
    %v274 = vrot.slane %v272, 4
    %v275 = vsel %vm181, %v273, %v274
    %vm276 = vcmask 7168
    %v277 = vsel %vm276, %v270, %v275
    %279 = vst [vmem:[#allocation3 + $0x18] sm:$0xff] %v277
    %v280 = vld [vmem:[#allocation2 + $0x4] sm:$0xff]
    %281 = vst [vmem:[#allocation3 + $0x20] sm:$0xff] %v280
    %v282 = vld [vmem:[#allocation2 + $0x4] sm:$0xff]
    %v283 = vld [vmem:[#allocation2 + $0xc] sm:$0xf]
    %284 = vrot.lane.b32.xlu0 %v209, 1
    %v285 = vpop.permute.xlu0 %284
    %v286 = vrot.slane %v285, 4
    %v287 = vsel %vm276, %v286, %v285
    %v288 = vunpack.c.l.b16 %v287
    %v289 = vunpack.c.h.b16 %v287
    %v290 = vunpack.c.l.b16 0
    %v291 = vunpack.c.h.b16 0
    %vm292 = vcmp.ne.s32.totalorder %v288, %v290
    %vm293 = vcmp.ne.s32.totalorder %v289, %v291
    %vm294 = vmpackc.low %vm293, %vm292
    %v295 = vunpack.c.l.b16 %v286
    %v296 = vunpack.c.h.b16 %v286
    %v297 = vunpack.c.l.b16 0
    %v298 = vunpack.c.h.b16 0
    %vm299 = vcmp.ne.s32.totalorder %v295, %v297
    %vm300 = vcmp.ne.s32.totalorder %v296, %v298
    %vm301 = vmpackc.low %vm300, %vm299
    %v302 = vsel %vm294, %v282, 0
    %v303 = vsel %vm301, %v283, 0
    %306 = vrot.lane.b32.xlu0 %v302, 127
    %v307 = vpop.permute.xlu0 %306
    %308 = vrot.lane.b32.xlu0 %v303, 127
    %v309 = vpop.permute.xlu0 %308
    %v310 = vrot.slane %v307, 4
    %v311 = vrot.slane %v309, 4
    %v312 = vsel %vm181, %v310, %v311
    %v313 = vsel %vm249, %v307, %v312
    %315 = vst [vmem:[#allocation3 + $0x28] sm:$0xff] %v313
    %v316 = vld [vmem:[#allocation2 + $0x4] sm:$0xff]
    %v317 = vld [vmem:[#allocation2 + $0xc] sm:$0xf]
    %318 = vrot.lane.b32.xlu0 %v151, 15
    %v319 = vpop.permute.xlu0 %318
    %v320 = vrot.slane %v319, 4
    %v321 = vsel %vm240, %v320, %v319
    %v322 = vunpack.c.l.b16 %v321
    %v323 = vunpack.c.h.b16 %v321
    %v324 = vunpack.c.l.b16 0
    %v325 = vunpack.c.h.b16 0
    %vm326 = vcmp.ne.s32.totalorder %v322, %v324
    %vm327 = vcmp.ne.s32.totalorder %v323, %v325
    %vm328 = vmpackc.low %vm327, %vm326
    %v329 = vunpack.c.l.b16 %v320
    %v330 = vunpack.c.h.b16 %v320
    %v331 = vunpack.c.l.b16 0
    %v332 = vunpack.c.h.b16 0
    %vm333 = vcmp.ne.s32.totalorder %v329, %v331
    %vm334 = vcmp.ne.s32.totalorder %v330, %v332
    %vm335 = vmpackc.low %vm334, %vm333
    %v336 = vsel %vm328, %v316, 0
    %v337 = vsel %vm335, %v317, 0
    %340 = vrot.lane.b32.xlu0 %v336, 113
    %v341 = vpop.permute.xlu0 %340
    %342 = vrot.lane.b32.xlu0 %v337, 113
    %v343 = vpop.permute.xlu0 %342
    %v344 = vrot.slane %v341, 4
    %v345 = vrot.slane %v343, 4
    %v346 = vsel %vm181, %v344, %v345
    %v347 = vsel %vm213, %v341, %v346
    %349 = vst [vmem:[#allocation3 + $0x30] sm:$0xff] %v347
    %v350 = vld [vmem:[#allocation2 + $0x4] sm:$0xff]
    %v351 = vld [vmem:[#allocation2 + $0xc] sm:$0xf]
    %354 = vrot.lane.b32.xlu0 %v350, 112
    %v355 = vpop.permute.xlu0 %354
    %356 = vrot.lane.b32.xlu0 %v351, 112
    %v357 = vpop.permute.xlu0 %356
    %v358 = vrot.slane %v355, 4
    %v359 = vrot.slane %v357, 4
    %v360 = vsel %vm181, %v358, %v359
    %vm361 = vcmask 916480
    %v362 = vsel %vm361, %v355, %v360
    %364 = vst [vmem:[#allocation3 + $0x38] sm:$0xff] %v362
    %v365 = vld [vmem:[#allocation2 + $0x4] sm:$0xff]
    %v366 = vld [vmem:[#allocation2 + $0xc] sm:$0xf]
    %367 = vrot.lane.b32.xlu0 %v209, 17
    %v368 = vpop.permute.xlu0 %367
    %v369 = vrot.slane %v368, 4
    %v370 = vsel %vm183, %v369, %v368
    %v371 = vunpack.c.l.b16 %v370
    %v372 = vunpack.c.h.b16 %v370
    %v373 = vunpack.c.l.b16 0
    %v374 = vunpack.c.h.b16 0
    %vm375 = vcmp.ne.s32.totalorder %v371, %v373
    %vm376 = vcmp.ne.s32.totalorder %v372, %v374
    %vm377 = vmpackc.low %vm376, %vm375
    %v378 = vunpack.c.l.b16 %v369
    %v379 = vunpack.c.h.b16 %v369
    %v380 = vunpack.c.l.b16 0
    %v381 = vunpack.c.h.b16 0
    %vm382 = vcmp.ne.s32.totalorder %v378, %v380
    %vm383 = vcmp.ne.s32.totalorder %v379, %v381
    %vm384 = vmpackc.low %vm383, %vm382
    %v385 = vsel %vm377, %v365, 0
    %v386 = vsel %vm384, %v366, 0
    %389 = vrot.lane.b32.xlu0 %v385, 111
    %v390 = vpop.permute.xlu0 %389
    %391 = vrot.lane.b32.xlu0 %v386, 111
    %v392 = vpop.permute.xlu0 %391
    %v393 = vrot.slane %v390, 4
    %v394 = vrot.slane %v392, 4
    %v395 = vsel %vm181, %v393, %v394
    %v396 = vsel %vm155, %v390, %v395
    %398 = vst [vmem:[#allocation3 + $0x40] sm:$0xff] %v396
    %v399 = vld [vmem:[%s3] sm:$0xf]
    %v400 = vld [vmem:[#allocation3] sm:$0xff]
    %v401 = vld [vmem:[#allocation3 + $0x8] sm:$0xff]
    %v402 = vld [vmem:[#allocation3 + $0x10] sm:$0xff]
    %v403 = vld [vmem:[#allocation3 + $0x18] sm:$0xff]
    %v404 = vld [vmem:[#allocation3 + $0x20] sm:$0xff]
    %v405 = vld [vmem:[#allocation3 + $0x28] sm:$0xff]
    %v406 = vld [vmem:[#allocation3 + $0x30] sm:$0xff]
    %v407 = vld [vmem:[#allocation3 + $0x38] sm:$0xff]
    %v408 = vld [vmem:[#allocation3 + $0x40] sm:$0xff]
    %v409 = vld [vmem:[%s4] sm:$0xff]
    %411 = vset.pattern.permute.xlu0 0
    %412 = vperm.xlu0 %411, %v409
    %v413 = vpop.permute.xlu0 %412
    %v424 = vunpack.c.l.b16 %v400
    %v425 = vunpack.c.h.b16 %v400
    %v426 = vunpack.c.l.b16 %v401
    %v427 = vunpack.c.h.b16 %v401
    %v428 = vunpack.c.l.b16 %v402
    %v429 = vunpack.c.h.b16 %v402
    %v430 = vunpack.c.l.b16 %v403
    %v431 = vunpack.c.h.b16 %v403
    %v432 = vunpack.c.l.b16 %v404
    %v433 = vunpack.c.h.b16 %v404
    %v434 = vunpack.c.l.b16 %v405
    %v435 = vunpack.c.h.b16 %v405
    %v436 = vunpack.c.l.b16 %v406
    %v437 = vunpack.c.h.b16 %v406
    %v438 = vunpack.c.l.b16 %v407
    %v439 = vunpack.c.h.b16 %v407
    %v440 = vunpack.c.l.b16 %v408
    %v441 = vunpack.c.h.b16 %v408
    %v442 = vpack.c.b16 %v426, %v424
    %v443 = vpack.c.b16 %v427, %v425
    %v444 = vpack.c.b16 %v430, %v428
    %v445 = vpack.c.b16 %v431, %v429
    %v446 = vpack.c.b16 %v434, %v432
    %v447 = vpack.c.b16 %v435, %v433
    %v448 = vpack.c.b16 %v438, %v436
    %v449 = vpack.c.b16 %v439, %v437
    %v450 = vpack.c.b16 %v440, %v440
    %v451 = vpack.c.b16 %v441, %v441
    %vm460 = vcmask 588800
    %v462 = vsel %vm460, %v399, 0
    %vm464 = vcmask 1043456
    %v466 = vsel %vm464, %v450, 0
    %v469 = vsel %vm464, %v451, 0
    %471 = vmatpush.bf16.msra.mxu0 0
    %472 = vmatpush.bf16.msra.mxu0 0
    %473 = vmatpush.bf16.msra.mxu0 0
    %474 = vmatpush.bf16.msra.mxu0 %v466
    %475 = vmatpush.bf16.msra.mxu0 %v448
    %476 = vmatpush.bf16.msra.mxu0 %v446
    %477 = vmatpush.bf16.msra.mxu0 %v444
    %478 = vmatpush.bf16.msra.mxu0 %v442
    %479 = vmatmul.bf16.gmra.mxu0 %v462
    %v480 = vpop.f32.mrf.mxu0
    %v481 = vadd.f32 %v413, %v480
    %v482 = vpop.f32.mrf.mxu0
    %483 = vdwg.mxu0
    %484 = vmatpush.bf16.msra.mxu0 0
    %485 = vmatpush.bf16.msra.mxu0 0
    %486 = vmatpush.bf16.msra.mxu0 0
    %487 = vmatpush.bf16.msra.mxu0 %v469
    %488 = vmatpush.bf16.msra.mxu0 %v449
    %489 = vmatpush.bf16.msra.mxu0 %v447
    %490 = vmatpush.bf16.msra.mxu0 %v445
    %491 = vmatpush.bf16.msra.mxu0 %v443
    %492 = vmatmul.bf16.gmra.mxu0 %v462
    %v493 = vpop.f32.mrf.mxu0
    %v494 = vadd.f32 %v413, %v493
    %v495 = vpop.f32.mrf.mxu0
    %496 = vdwg.mxu0
    %v497 = vmax.f32 %v481, 0.0
    %v498 = vmax.f32 %v494, 0.0
    %v499 = vld [vmem:[%s5] sm:$0xf]
    %v500 = vld [vmem:[%s5 + $0x4] sm:$0xf]
    %v501 = vld [vmem:[%s5 + $0x8] sm:$0xf]
    %v502 = vld [vmem:[%s5 + $0xc] sm:$0xf]
    %v503 = vpack.c.bf16 %v497, %v497
    %v504 = vpack.c.bf16 %v498, %v498
    %v505 = vld [vmem:[%s6] sm:$0xff]
    %v506 = vld [vmem:[%s6 + $0x8] sm:$0xff]
    %v507 = vld [vmem:[%s6 + $0x10] sm:$0xff]
    %v508 = vld [vmem:[%s6 + $0x18] sm:$0xff]
    %510 = vset.pattern.permute.xlu0 0
    %511 = vperm.xlu0 %510, %v505
    %v512 = vpop.permute.xlu0 %511
    %515 = vset.pattern.permute.xlu0 0
    %516 = vperm.xlu0 %515, %v506
    %v517 = vpop.permute.xlu0 %516
    %520 = vset.pattern.permute.xlu0 0
    %521 = vperm.xlu0 %520, %v507
    %v522 = vpop.permute.xlu0 %521
    %525 = vset.pattern.permute.xlu0 0
    %526 = vperm.xlu0 %525, %v508
    %v527 = vpop.permute.xlu0 %526
    %v533 = vunpack.c.l.b16 %v499
    %v534 = vunpack.c.l.b16 %v500
    %v535 = vunpack.c.l.b16 %v501
    %v536 = vunpack.c.l.b16 %v502
    %v537 = vpack.c.b16 %v534, %v533
    %v538 = vpack.c.b16 %v536, %v535
    %vm539 = vcmask 64512
    %v541 = vsel %vm539, %v537, 0
    %v544 = vsel %vm539, %v538, 0
    %v547 = vsel %vm464, %v503, 0
    %v550 = vsel %vm464, %v504, 0
    %552 = vmatpush.bf16.msra.mxu0 0
    %553 = vmatpush.bf16.msra.mxu0 0
    %554 = vmatpush.bf16.msra.mxu0 0
    %555 = vmatpush.bf16.msra.mxu0 0
    %556 = vmatpush.bf16.msra.mxu0 0
    %557 = vmatpush.bf16.msra.mxu0 0
    %558 = vmatpush.bf16.msra.mxu0 0
    %559 = vmatpush.bf16.msra.mxu0 %v547
    %560 = vmatmul.bf16.gmra.mxu0 %v541
    %v561 = vpop.f32.mrf.mxu0
    %v562 = vadd.f32 %v512, %v561
    %v563 = vpop.f32.mrf.mxu0
    %v564 = vadd.f32 %v517, %v563
    %565 = vmatmul.bf16.gmra.mxu0 %v544
    %v566 = vpop.f32.mrf.mxu0
    %v567 = vadd.f32 %v522, %v566
    %v568 = vpop.f32.mrf.mxu0
    %v569 = vadd.f32 %v527, %v568
    %570 = vdwg.mxu0
    %571 = vmatpush.bf16.msra.mxu0 0
    %572 = vmatpush.bf16.msra.mxu0 0
    %573 = vmatpush.bf16.msra.mxu0 0
    %574 = vmatpush.bf16.msra.mxu0 0
    %575 = vmatpush.bf16.msra.mxu0 0
    %576 = vmatpush.bf16.msra.mxu0 0
    %577 = vmatpush.bf16.msra.mxu0 0
    %578 = vmatpush.bf16.msra.mxu0 %v550
    %579 = vmatmul.bf16.gmra.mxu0 %v541
    %v580 = vpop.f32.mrf.mxu0
    %v581 = vadd.f32 %v512, %v580
    %v582 = vpop.f32.mrf.mxu0
    %v583 = vadd.f32 %v517, %v582
    %584 = vmatmul.bf16.gmra.mxu0 %v544
    %v585 = vpop.f32.mrf.mxu0
    %v586 = vadd.f32 %v522, %v585
    %v587 = vpop.f32.mrf.mxu0
    %v588 = vadd.f32 %v527, %v587
    %589 = vdwg.mxu0
    %v590 = vadd.f32 %v562, %v581
    %591 = vadd.xlane.f32.xlu0 %v590
    %v592 = vpop.xlane.xlu0 %591
    %v593 = vadd.f32 %v564, %v583
    %594 = vadd.xlane.f32.xlu0 %v593
    %v595 = vpop.xlane.xlu0 %594
    %v596 = vadd.f32 %v567, %v586
    %597 = vadd.xlane.f32.xlu0 %v596
    %v598 = vpop.xlane.xlu0 %597
    %v599 = vadd.f32 %v569, %v588
    %600 = vadd.xlane.f32.xlu0 %v599
    %v601 = vpop.xlane.xlu0 %600
    %v602 = vmul.f32 %v592, 0.00390625
    %v603 = vmul.f32 %v595, 0.00390625
    %v604 = vmul.f32 %v598, 0.00390625
    %v605 = vmul.f32 %v601, 0.00390625
    %v606 = vld [vmem:[%s7] sm:$0xff]
    %v607 = vld [vmem:[%s7 + $0x8] sm:$0xff]
    %v608 = vld [vmem:[%s7 + $0x10] sm:$0xff]
    %v609 = vld [vmem:[%s7 + $0x18] sm:$0xff]
    %v610 = vmul.f32 %v606, %v602
    %v611 = vmul.f32 %v607, %v603
    %v612 = vmul.f32 %v608, %v604
    %v613 = vmul.f32 %v609, %v605
    %vm614 = vcmask 15360
    %v615 = vsel %vm614, %v610, 0.0
    %v616 = vsel %vm614, %v611, 0.0
    %v617 = vadd.f32 %v615, %v616
    %v618 = vsel %vm614, %v612, 0.0
    %v619 = vadd.f32 %v617, %v618
    %v620 = vsel %vm614, %v613, 0.0
    %v621 = vadd.f32 %v619, %v620
    %v622 = vrot.slane %v621, 4
    %v623 = vadd.f32 %v621, %v622
    %v624 = vrot.slane %v623, 2
    %v625 = vadd.f32 %v623, %v624
    %v626 = vrot.slane %v625, 1
    %v627 = vadd.f32 %v625, %v626
    %v628 = vld [vmem:[%s8] sm:$0x1]
    %v629 = vadd.f32 %v627, %v628
    %v630 = vmax.f32 %v629, 0.0
    %v631 = vld [vmem:[%s9] sm:$0xff]
    %v632 = vld [vmem:[%s9 + $0x8] sm:$0xff]
    %v633 = vld [vmem:[%s9 + $0x10] sm:$0xff]
    %v634 = vld [vmem:[%s9 + $0x18] sm:$0xff]
    %v635 = vperm.slane %v630, 0
    %v636 = vmul.f32 %v631, %v635
    %v637 = vmul.f32 %v632, %v635
    %v638 = vmul.f32 %v633, %v635
    %v639 = vmul.f32 %v634, %v635
    %v640 = vsel %vm614, %v636, 0.0
    %641 = vadd.xlane.f32.xlu0 %v640
    %v642 = vpop.xlane.xlu0 %641
    %v643 = vsel %vm614, %v637, 0.0
    %644 = vadd.xlane.f32.xlu0 %v643
    %v645 = vpop.xlane.xlu0 %644
    %v646 = vsel %vm614, %v638, 0.0
    %647 = vadd.xlane.f32.xlu0 %v646
    %v648 = vpop.xlane.xlu0 %647
    %v649 = vsel %vm614, %v639, 0.0
    %650 = vadd.xlane.f32.xlu0 %v649
    %v651 = vpop.xlane.xlu0 %650
    %v652 = vld [vmem:[%s10] sm:$0xff]
    %v653 = vld [vmem:[%s10 + $0x8] sm:$0xff]
    %v654 = vld [vmem:[%s10 + $0x10] sm:$0xff]
    %v655 = vld [vmem:[%s10 + $0x18] sm:$0xff]
    %v656 = vadd.f32 %v642, %v652
    %v657 = vadd.f32 %v645, %v653
    %v658 = vadd.f32 %v648, %v654
    %v659 = vadd.f32 %v651, %v655
    %v660 = vsub.f32 0.0, %v656
    %v661 = vsub.f32 0.0, %v657
    %v662 = vsub.f32 0.0, %v658
    %v663 = vsub.f32 0.0, %v659
    %v664 = vmul.f32 %v660, 1.442695
    %v665 = vpow.pop %v664
    %v666 = vmul.f32 %v661, 1.442695
    %v667 = vpow.pop %v666
    %v668 = vmul.f32 %v662, 1.442695
    %v669 = vpow.pop %v668
    %v670 = vmul.f32 %v663, 1.442695
    %v671 = vpow.pop %v670
    %v672 = vadd.f32 %v665, 1.0
    %v673 = vadd.f32 %v667, 1.0
    %v674 = vadd.f32 %v669, 1.0
    %v675 = vadd.f32 %v671, 1.0
    %v676 = vrcp.pop %v672
    %v677 = vrcp.pop %v673
    %v678 = vrcp.pop %v674
    %v679 = vrcp.pop %v675
    %681 = vset.pattern.permute.xlu0 0
    %682 = vperm.xlu0 %681, %v676
    %v683 = vpop.permute.xlu0 %682
    %686 = vset.pattern.permute.xlu0 0
    %687 = vperm.xlu0 %686, %v677
    %v688 = vpop.permute.xlu0 %687
    %691 = vset.pattern.permute.xlu0 0
    %692 = vperm.xlu0 %691, %v678
    %v693 = vpop.permute.xlu0 %692
    %696 = vset.pattern.permute.xlu0 0
    %697 = vperm.xlu0 %696, %v679
    %v698 = vpop.permute.xlu0 %697
    %v700 = vmul.f32 %v562, %v683
    %v701 = vmul.f32 %v581, %v683
    %v702 = vmul.f32 %v564, %v688
    %v703 = vmul.f32 %v583, %v688
    %v704 = vmul.f32 %v567, %v693
    %v705 = vmul.f32 %v586, %v693
    %v706 = vmul.f32 %v569, %v698
    %v707 = vmul.f32 %v588, %v698
    %v708 = vadd.f32 %v700, %v91
    %v709 = vadd.f32 %v701, %v92
    %v710 = vadd.f32 %v702, %v93
    %v711 = vadd.f32 %v703, %v94
    %v712 = vadd.f32 %v704, %v95
    %v713 = vadd.f32 %v705, %v96
    %v714 = vadd.f32 %v706, %v97
    %v715 = vadd.f32 %v707, %v98
    %v716 = vmax.f32 %v708, 0.0
    %v717 = vmax.f32 %v709, 0.0
    %v718 = vmax.f32 %v710, 0.0
    %v719 = vmax.f32 %v711, 0.0
    %v720 = vmax.f32 %v712, 0.0
    %v721 = vmax.f32 %v713, 0.0
    %v722 = vmax.f32 %v714, 0.0
    %v723 = vmax.f32 %v715, 0.0
    %724 = vst [vmem:[#allocation7] sm:$0xff] %v716
    %725 = vst [vmem:[#allocation7 + $0x8] sm:$0xff] %v717
    %726 = vst [vmem:[#allocation7 + $0x10] sm:$0xff] %v718
    %727 = vst [vmem:[#allocation7 + $0x18] sm:$0xff] %v719
    %728 = vst [vmem:[#allocation7 + $0x20] sm:$0xff] %v720
    %729 = vst [vmem:[#allocation7 + $0x28] sm:$0xff] %v721
    %730 = vst [vmem:[#allocation7 + $0x30] sm:$0xff] %v722
    %731 = vst [vmem:[#allocation7 + $0x38] sm:$0xff] %v723
    %s732 = scalar_lea.vmem [#allocation4], 64
    %v733 = vld [vmem:[%s732] sm:$0xff]
    %v734 = vld [vmem:[%s732 + $0x8] sm:$0xff]
    %v735 = vld [vmem:[%s732 + $0x10] sm:$0xff]
    %v736 = vld [vmem:[%s732 + $0x18] sm:$0xff]
    %v737 = vld [vmem:[%s732 + $0x20] sm:$0xff]
    %v738 = vld [vmem:[%s732 + $0x28] sm:$0xff]
    %v739 = vld [vmem:[%s732 + $0x30] sm:$0xff]
    %v740 = vld [vmem:[%s732 + $0x38] sm:$0xff]
    %v741 = vld [vmem:[%s1] sm:$0xf]
    %v742 = vpack.c.bf16 %v735, %v733
    %v743 = vpack.c.bf16 %v736, %v734
    %v744 = vpack.c.bf16 %v739, %v737
    %v745 = vpack.c.bf16 %v740, %v738
    %v746 = vld [vmem:[%s2] sm:$0xff]
    %748 = vset.pattern.permute.xlu0 0
    %749 = vperm.xlu0 %748, %v746
    %v750 = vpop.permute.xlu0 %749
    %v753 = vsel %vm110, %v741, 0
    %755 = vmatpush.bf16.msra.mxu0 0
    %756 = vmatpush.bf16.msra.mxu0 0
    %757 = vmatpush.bf16.msra.mxu0 0
    %758 = vmatpush.bf16.msra.mxu0 0
    %759 = vmatpush.bf16.msra.mxu0 0
    %760 = vmatpush.bf16.msra.mxu0 0
    %761 = vmatpush.bf16.msra.mxu0 %v744
    %762 = vmatpush.bf16.msra.mxu0 %v742
    %763 = vmatmul.bf16.gmra.mxu0 %v753
    %v764 = vpop.f32.mrf.mxu0
    %v765 = vadd.f32 %v750, %v764
    %v766 = vpop.f32.mrf.mxu0
    %767 = vdwg.mxu0
    %768 = vmatpush.bf16.msra.mxu0 0
    %769 = vmatpush.bf16.msra.mxu0 0
    %770 = vmatpush.bf16.msra.mxu0 0
    %771 = vmatpush.bf16.msra.mxu0 0
    %772 = vmatpush.bf16.msra.mxu0 0
    %773 = vmatpush.bf16.msra.mxu0 0
    %774 = vmatpush.bf16.msra.mxu0 %v745
    %775 = vmatpush.bf16.msra.mxu0 %v743
    %776 = vmatmul.bf16.gmra.mxu0 %v753
    %v777 = vpop.f32.mrf.mxu0
    %v778 = vadd.f32 %v750, %v777
    %v779 = vpop.f32.mrf.mxu0
    %780 = vdwg.mxu0
    %v781 = vmax.f32 %v765, 0.0
    %v782 = vmax.f32 %v778, 0.0
    %v783 = vpack.c.bf16 %v782, %v781
    %784 = vst [vmem:[#allocation2 + $0x4] sm:$0xff] %v783
    %v785 = vld [vmem:[#allocation2] sm:$0xff]
    %v786 = vld [vmem:[#allocation2 + $0x8] sm:$0xf]
    %v787 = vsel %vm163, %v785, 0
    %v788 = vsel %vm170, %v786, 0
    %791 = vrot.lane.b32.xlu0 %v787, 17
    %v792 = vpop.permute.xlu0 %791
    %793 = vrot.lane.b32.xlu0 %v788, 17
    %v794 = vpop.permute.xlu0 %793
    %v795 = vrot.slane %v792, 4
    %v796 = vrot.slane %v794, 4
    %v797 = vsel %vm181, %v795, %v796
    %v798 = vsel %vm183, %v792, %v797
    %800 = vst [vmem:[#allocation3] sm:$0xff] %v798
    %v801 = vld [vmem:[#allocation2] sm:$0xff]
    %v802 = vld [vmem:[#allocation2 + $0x8] sm:$0xf]
    %805 = vrot.lane.b32.xlu0 %v801, 16
    %v806 = vpop.permute.xlu0 %805
    %807 = vrot.lane.b32.xlu0 %v802, 16
    %v808 = vpop.permute.xlu0 %807
    %v809 = vrot.slane %v806, 4
    %v810 = vrot.slane %v808, 4
    %v811 = vsel %vm181, %v809, %v810
    %v812 = vsel %vm198, %v806, %v811
    %814 = vst [vmem:[#allocation3 + $0x8] sm:$0xff] %v812
    %v815 = vld [vmem:[#allocation2] sm:$0xff]
    %v816 = vld [vmem:[#allocation2 + $0x8] sm:$0xf]
    %v817 = vsel %vm221, %v815, 0
    %v818 = vsel %vm228, %v816, 0
    %821 = vrot.lane.b32.xlu0 %v817, 15
    %v822 = vpop.permute.xlu0 %821
    %823 = vrot.lane.b32.xlu0 %v818, 15
    %v824 = vpop.permute.xlu0 %823
    %v825 = vrot.slane %v822, 4
    %v826 = vrot.slane %v824, 4
    %v827 = vsel %vm181, %v825, %v826
    %v828 = vsel %vm240, %v822, %v827
    %830 = vst [vmem:[#allocation3 + $0x10] sm:$0xff] %v828
    %v831 = vld [vmem:[#allocation2] sm:$0xff]
    %v832 = vld [vmem:[#allocation2 + $0x8] sm:$0xf]
    %v833 = vsel %vm257, %v831, 0
    %v834 = vsel %vm264, %v832, 0
    %837 = vrot.lane.b32.xlu0 %v833, 1
    %v838 = vpop.permute.xlu0 %837
    %839 = vrot.lane.b32.xlu0 %v834, 1
    %v840 = vpop.permute.xlu0 %839
    %v841 = vrot.slane %v838, 4
    %v842 = vrot.slane %v840, 4
    %v843 = vsel %vm181, %v841, %v842
    %v844 = vsel %vm276, %v838, %v843
    %846 = vst [vmem:[#allocation3 + $0x18] sm:$0xff] %v844
    %v847 = vld [vmem:[#allocation2 + $0x4] sm:$0xff]
    %848 = vst [vmem:[#allocation3 + $0x20] sm:$0xff] %v847
    %v849 = vld [vmem:[#allocation2 + $0x4] sm:$0xff]
    %v850 = vld [vmem:[#allocation2 + $0xc] sm:$0xf]
    %v851 = vsel %vm294, %v849, 0
    %v852 = vsel %vm301, %v850, 0
    %855 = vrot.lane.b32.xlu0 %v851, 127
    %v856 = vpop.permute.xlu0 %855
    %857 = vrot.lane.b32.xlu0 %v852, 127
    %v858 = vpop.permute.xlu0 %857
    %v859 = vrot.slane %v856, 4
    %v860 = vrot.slane %v858, 4
    %v861 = vsel %vm181, %v859, %v860
    %v862 = vsel %vm249, %v856, %v861
    %864 = vst [vmem:[#allocation3 + $0x28] sm:$0xff] %v862
    %v865 = vld [vmem:[#allocation2 + $0x4] sm:$0xff]
    %v866 = vld [vmem:[#allocation2 + $0xc] sm:$0xf]
    %v867 = vsel %vm328, %v865, 0
    %v868 = vsel %vm335, %v866, 0
    %871 = vrot.lane.b32.xlu0 %v867, 113
    %v872 = vpop.permute.xlu0 %871
    %873 = vrot.lane.b32.xlu0 %v868, 113
    %v874 = vpop.permute.xlu0 %873
    %v875 = vrot.slane %v872, 4
    %v876 = vrot.slane %v874, 4
    %v877 = vsel %vm181, %v875, %v876
    %v878 = vsel %vm213, %v872, %v877
    %880 = vst [vmem:[#allocation3 + $0x30] sm:$0xff] %v878
    %v881 = vld [vmem:[#allocation2 + $0x4] sm:$0xff]
    %v882 = vld [vmem:[#allocation2 + $0xc] sm:$0xf]
    %885 = vrot.lane.b32.xlu0 %v881, 112
    %v886 = vpop.permute.xlu0 %885
    %887 = vrot.lane.b32.xlu0 %v882, 112
    %v888 = vpop.permute.xlu0 %887
    %v889 = vrot.slane %v886, 4
    %v890 = vrot.slane %v888, 4
    %v891 = vsel %vm181, %v889, %v890
    %v892 = vsel %vm361, %v886, %v891
    %894 = vst [vmem:[#allocation3 + $0x38] sm:$0xff] %v892
    %v895 = vld [vmem:[#allocation2 + $0x4] sm:$0xff]
    %v896 = vld [vmem:[#allocation2 + $0xc] sm:$0xf]
    %v897 = vsel %vm377, %v895, 0
    %v898 = vsel %vm384, %v896, 0
    %901 = vrot.lane.b32.xlu0 %v897, 111
    %v902 = vpop.permute.xlu0 %901
    %903 = vrot.lane.b32.xlu0 %v898, 111
    %v904 = vpop.permute.xlu0 %903
    %v905 = vrot.slane %v902, 4
    %v906 = vrot.slane %v904, 4
    %v907 = vsel %vm181, %v905, %v906
    %v908 = vsel %vm155, %v902, %v907
    %910 = vst [vmem:[#allocation3 + $0x40] sm:$0xff] %v908
    %v911 = vld [vmem:[%s3] sm:$0xf]
    %v912 = vld [vmem:[#allocation3] sm:$0xff]
    %v913 = vld [vmem:[#allocation3 + $0x8] sm:$0xff]
    %v914 = vld [vmem:[#allocation3 + $0x10] sm:$0xff]
    %v915 = vld [vmem:[#allocation3 + $0x18] sm:$0xff]
    %v916 = vld [vmem:[#allocation3 + $0x20] sm:$0xff]
    %v917 = vld [vmem:[#allocation3 + $0x28] sm:$0xff]
    %v918 = vld [vmem:[#allocation3 + $0x30] sm:$0xff]
    %v919 = vld [vmem:[#allocation3 + $0x38] sm:$0xff]
    %v920 = vld [vmem:[#allocation3 + $0x40] sm:$0xff]
    %v921 = vld [vmem:[%s4] sm:$0xff]
    %923 = vset.pattern.permute.xlu0 0
    %924 = vperm.xlu0 %923, %v921
    %v925 = vpop.permute.xlu0 %924
    %v936 = vunpack.c.l.b16 %v912
    %v937 = vunpack.c.h.b16 %v912
    %v938 = vunpack.c.l.b16 %v913
    %v939 = vunpack.c.h.b16 %v913
    %v940 = vunpack.c.l.b16 %v914
    %v941 = vunpack.c.h.b16 %v914
    %v942 = vunpack.c.l.b16 %v915
    %v943 = vunpack.c.h.b16 %v915
    %v944 = vunpack.c.l.b16 %v916
    %v945 = vunpack.c.h.b16 %v916
    %v946 = vunpack.c.l.b16 %v917
    %v947 = vunpack.c.h.b16 %v917
    %v948 = vunpack.c.l.b16 %v918
    %v949 = vunpack.c.h.b16 %v918
    %v950 = vunpack.c.l.b16 %v919
    %v951 = vunpack.c.h.b16 %v919
    %v952 = vunpack.c.l.b16 %v920
    %v953 = vunpack.c.h.b16 %v920
    %v954 = vpack.c.b16 %v938, %v936
    %v955 = vpack.c.b16 %v939, %v937
    %v956 = vpack.c.b16 %v942, %v940
    %v957 = vpack.c.b16 %v943, %v941
    %v958 = vpack.c.b16 %v946, %v944
    %v959 = vpack.c.b16 %v947, %v945
    %v960 = vpack.c.b16 %v950, %v948
    %v961 = vpack.c.b16 %v951, %v949
    %v962 = vpack.c.b16 %v952, %v952
    %v963 = vpack.c.b16 %v953, %v953
    %v973 = vsel %vm460, %v911, 0
    %v976 = vsel %vm464, %v962, 0
    %v979 = vsel %vm464, %v963, 0
    %981 = vmatpush.bf16.msra.mxu0 0
    %982 = vmatpush.bf16.msra.mxu0 0
    %983 = vmatpush.bf16.msra.mxu0 0
    %984 = vmatpush.bf16.msra.mxu0 %v976
    %985 = vmatpush.bf16.msra.mxu0 %v960
    %986 = vmatpush.bf16.msra.mxu0 %v958
    %987 = vmatpush.bf16.msra.mxu0 %v956
    %988 = vmatpush.bf16.msra.mxu0 %v954
    %989 = vmatmul.bf16.gmra.mxu0 %v973
    %v990 = vpop.f32.mrf.mxu0
    %v991 = vadd.f32 %v925, %v990
    %v992 = vpop.f32.mrf.mxu0
    %993 = vdwg.mxu0
    %994 = vmatpush.bf16.msra.mxu0 0
    %995 = vmatpush.bf16.msra.mxu0 0
    %996 = vmatpush.bf16.msra.mxu0 0
    %997 = vmatpush.bf16.msra.mxu0 %v979
    %998 = vmatpush.bf16.msra.mxu0 %v961
    %999 = vmatpush.bf16.msra.mxu0 %v959
    %1000 = vmatpush.bf16.msra.mxu0 %v957
    %1001 = vmatpush.bf16.msra.mxu0 %v955
    %1002 = vmatmul.bf16.gmra.mxu0 %v973
    %v1003 = vpop.f32.mrf.mxu0
    %v1004 = vadd.f32 %v925, %v1003
    %v1005 = vpop.f32.mrf.mxu0
    %1006 = vdwg.mxu0
    %v1007 = vmax.f32 %v991, 0.0
    %v1008 = vmax.f32 %v1004, 0.0
    %v1009 = vld [vmem:[%s5] sm:$0xf]
    %v1010 = vld [vmem:[%s5 + $0x4] sm:$0xf]
    %v1011 = vld [vmem:[%s5 + $0x8] sm:$0xf]
    %v1012 = vld [vmem:[%s5 + $0xc] sm:$0xf]
    %v1013 = vpack.c.bf16 %v1007, %v1007
    %v1014 = vpack.c.bf16 %v1008, %v1008
    %v1015 = vld [vmem:[%s6] sm:$0xff]
    %v1016 = vld [vmem:[%s6 + $0x8] sm:$0xff]
    %v1017 = vld [vmem:[%s6 + $0x10] sm:$0xff]
    %v1018 = vld [vmem:[%s6 + $0x18] sm:$0xff]
    %1020 = vset.pattern.permute.xlu0 0
    %1021 = vperm.xlu0 %1020, %v1015
    %v1022 = vpop.permute.xlu0 %1021
    %1025 = vset.pattern.permute.xlu0 0
    %1026 = vperm.xlu0 %1025, %v1016
    %v1027 = vpop.permute.xlu0 %1026
    %1030 = vset.pattern.permute.xlu0 0
    %1031 = vperm.xlu0 %1030, %v1017
    %v1032 = vpop.permute.xlu0 %1031
    %1035 = vset.pattern.permute.xlu0 0
    %1036 = vperm.xlu0 %1035, %v1018
    %v1037 = vpop.permute.xlu0 %1036
    %v1043 = vunpack.c.l.b16 %v1009
    %v1044 = vunpack.c.l.b16 %v1010
    %v1045 = vunpack.c.l.b16 %v1011
    %v1046 = vunpack.c.l.b16 %v1012
    %v1047 = vpack.c.b16 %v1044, %v1043
    %v1048 = vpack.c.b16 %v1046, %v1045
    %v1050 = vsel %vm539, %v1047, 0
    %v1053 = vsel %vm539, %v1048, 0
    %v1056 = vsel %vm464, %v1013, 0
    %v1059 = vsel %vm464, %v1014, 0
    %1061 = vmatpush.bf16.msra.mxu0 0
    %1062 = vmatpush.bf16.msra.mxu0 0
    %1063 = vmatpush.bf16.msra.mxu0 0
    %1064 = vmatpush.bf16.msra.mxu0 0
    %1065 = vmatpush.bf16.msra.mxu0 0
    %1066 = vmatpush.bf16.msra.mxu0 0
    %1067 = vmatpush.bf16.msra.mxu0 0
    %1068 = vmatpush.bf16.msra.mxu0 %v1056
    %1069 = vmatmul.bf16.gmra.mxu0 %v1050
    %v1070 = vpop.f32.mrf.mxu0
    %v1071 = vadd.f32 %v1022, %v1070
    %v1072 = vpop.f32.mrf.mxu0
    %v1073 = vadd.f32 %v1027, %v1072
    %1074 = vmatmul.bf16.gmra.mxu0 %v1053
    %v1075 = vpop.f32.mrf.mxu0
    %v1076 = vadd.f32 %v1032, %v1075
    %v1077 = vpop.f32.mrf.mxu0
    %v1078 = vadd.f32 %v1037, %v1077
    %1079 = vdwg.mxu0
    %1080 = vmatpush.bf16.msra.mxu0 0
    %1081 = vmatpush.bf16.msra.mxu0 0
    %1082 = vmatpush.bf16.msra.mxu0 0
    %1083 = vmatpush.bf16.msra.mxu0 0
    %1084 = vmatpush.bf16.msra.mxu0 0
    %1085 = vmatpush.bf16.msra.mxu0 0
    %1086 = vmatpush.bf16.msra.mxu0 0
    %1087 = vmatpush.bf16.msra.mxu0 %v1059
    %1088 = vmatmul.bf16.gmra.mxu0 %v1050
    %v1089 = vpop.f32.mrf.mxu0
    %v1090 = vadd.f32 %v1022, %v1089
    %v1091 = vpop.f32.mrf.mxu0
    %v1092 = vadd.f32 %v1027, %v1091
    %1093 = vmatmul.bf16.gmra.mxu0 %v1053
    %v1094 = vpop.f32.mrf.mxu0
    %v1095 = vadd.f32 %v1032, %v1094
    %v1096 = vpop.f32.mrf.mxu0
    %v1097 = vadd.f32 %v1037, %v1096
    %1098 = vdwg.mxu0
    %v1099 = vadd.f32 %v1071, %v1090
    %1100 = vadd.xlane.f32.xlu0 %v1099
    %v1101 = vpop.xlane.xlu0 %1100
    %v1102 = vadd.f32 %v1073, %v1092
    %1103 = vadd.xlane.f32.xlu0 %v1102
    %v1104 = vpop.xlane.xlu0 %1103
    %v1105 = vadd.f32 %v1076, %v1095
    %1106 = vadd.xlane.f32.xlu0 %v1105
    %v1107 = vpop.xlane.xlu0 %1106
    %v1108 = vadd.f32 %v1078, %v1097
    %1109 = vadd.xlane.f32.xlu0 %v1108
    %v1110 = vpop.xlane.xlu0 %1109
    %v1111 = vmul.f32 %v1101, 0.00390625
    %v1112 = vmul.f32 %v1104, 0.00390625
    %v1113 = vmul.f32 %v1107, 0.00390625
    %v1114 = vmul.f32 %v1110, 0.00390625
    %v1115 = vld [vmem:[%s7] sm:$0xff]
    %v1116 = vld [vmem:[%s7 + $0x8] sm:$0xff]
    %v1117 = vld [vmem:[%s7 + $0x10] sm:$0xff]
    %v1118 = vld [vmem:[%s7 + $0x18] sm:$0xff]
    %v1119 = vmul.f32 %v1115, %v1111
    %v1120 = vmul.f32 %v1116, %v1112
    %v1121 = vmul.f32 %v1117, %v1113
    %v1122 = vmul.f32 %v1118, %v1114
    %v1123 = vsel %vm614, %v1119, 0.0
    %v1124 = vsel %vm614, %v1120, 0.0
    %v1125 = vadd.f32 %v1123, %v1124
    %v1126 = vsel %vm614, %v1121, 0.0
    %v1127 = vadd.f32 %v1125, %v1126
    %v1128 = vsel %vm614, %v1122, 0.0
    %v1129 = vadd.f32 %v1127, %v1128
    %v1130 = vrot.slane %v1129, 4
    %v1131 = vadd.f32 %v1129, %v1130
    %v1132 = vrot.slane %v1131, 2
    %v1133 = vadd.f32 %v1131, %v1132
    %v1134 = vrot.slane %v1133, 1
    %v1135 = vadd.f32 %v1133, %v1134
    %v1136 = vld [vmem:[%s8] sm:$0x1]
    %v1137 = vadd.f32 %v1135, %v1136
    %v1138 = vmax.f32 %v1137, 0.0
    %v1139 = vld [vmem:[%s9] sm:$0xff]
    %v1140 = vld [vmem:[%s9 + $0x8] sm:$0xff]
    %v1141 = vld [vmem:[%s9 + $0x10] sm:$0xff]
    %v1142 = vld [vmem:[%s9 + $0x18] sm:$0xff]
    %v1143 = vperm.slane %v1138, 0
    %v1144 = vmul.f32 %v1139, %v1143
    %v1145 = vmul.f32 %v1140, %v1143
    %v1146 = vmul.f32 %v1141, %v1143
    %v1147 = vmul.f32 %v1142, %v1143
    %v1148 = vsel %vm614, %v1144, 0.0
    %1149 = vadd.xlane.f32.xlu0 %v1148
    %v1150 = vpop.xlane.xlu0 %1149
    %v1151 = vsel %vm614, %v1145, 0.0
    %1152 = vadd.xlane.f32.xlu0 %v1151
    %v1153 = vpop.xlane.xlu0 %1152
    %v1154 = vsel %vm614, %v1146, 0.0
    %1155 = vadd.xlane.f32.xlu0 %v1154
    %v1156 = vpop.xlane.xlu0 %1155
    %v1157 = vsel %vm614, %v1147, 0.0
    %1158 = vadd.xlane.f32.xlu0 %v1157
    %v1159 = vpop.xlane.xlu0 %1158
    %v1160 = vld [vmem:[%s10] sm:$0xff]
    %v1161 = vld [vmem:[%s10 + $0x8] sm:$0xff]
    %v1162 = vld [vmem:[%s10 + $0x10] sm:$0xff]
    %v1163 = vld [vmem:[%s10 + $0x18] sm:$0xff]
    %v1164 = vadd.f32 %v1150, %v1160
    %v1165 = vadd.f32 %v1153, %v1161
    %v1166 = vadd.f32 %v1156, %v1162
    %v1167 = vadd.f32 %v1159, %v1163
    %v1168 = vsub.f32 0.0, %v1164
    %v1169 = vsub.f32 0.0, %v1165
    %v1170 = vsub.f32 0.0, %v1166
    %v1171 = vsub.f32 0.0, %v1167
    %v1172 = vmul.f32 %v1168, 1.442695
    %v1173 = vpow.pop %v1172
    %v1174 = vmul.f32 %v1169, 1.442695
    %v1175 = vpow.pop %v1174
    %v1176 = vmul.f32 %v1170, 1.442695
    %v1177 = vpow.pop %v1176
    %v1178 = vmul.f32 %v1171, 1.442695
    %v1179 = vpow.pop %v1178
    %v1180 = vadd.f32 %v1173, 1.0
    %v1181 = vadd.f32 %v1175, 1.0
    %v1182 = vadd.f32 %v1177, 1.0
    %v1183 = vadd.f32 %v1179, 1.0
    %v1184 = vrcp.pop %v1180
    %v1185 = vrcp.pop %v1181
    %v1186 = vrcp.pop %v1182
    %v1187 = vrcp.pop %v1183
    %1189 = vset.pattern.permute.xlu0 0
    %1190 = vperm.xlu0 %1189, %v1184
    %v1191 = vpop.permute.xlu0 %1190
    %1194 = vset.pattern.permute.xlu0 0
    %1195 = vperm.xlu0 %1194, %v1185
    %v1196 = vpop.permute.xlu0 %1195
    %1199 = vset.pattern.permute.xlu0 0
    %1200 = vperm.xlu0 %1199, %v1186
    %v1201 = vpop.permute.xlu0 %1200
    %1204 = vset.pattern.permute.xlu0 0
    %1205 = vperm.xlu0 %1204, %v1187
    %v1206 = vpop.permute.xlu0 %1205
    %v1208 = vmul.f32 %v1071, %v1191
    %v1209 = vmul.f32 %v1090, %v1191
    %v1210 = vmul.f32 %v1073, %v1196
    %v1211 = vmul.f32 %v1092, %v1196
    %v1212 = vmul.f32 %v1076, %v1201
    %v1213 = vmul.f32 %v1095, %v1201
    %v1214 = vmul.f32 %v1078, %v1206
    %v1215 = vmul.f32 %v1097, %v1206
    %v1216 = vadd.f32 %v1208, %v733
    %v1217 = vadd.f32 %v1209, %v734
    %v1218 = vadd.f32 %v1210, %v735
    %v1219 = vadd.f32 %v1211, %v736
    %v1220 = vadd.f32 %v1212, %v737
    %v1221 = vadd.f32 %v1213, %v738
    %v1222 = vadd.f32 %v1214, %v739
    %v1223 = vadd.f32 %v1215, %v740
    %v1224 = vmax.f32 %v1216, 0.0
    %v1225 = vmax.f32 %v1217, 0.0
    %v1226 = vmax.f32 %v1218, 0.0
    %v1227 = vmax.f32 %v1219, 0.0
    %v1228 = vmax.f32 %v1220, 0.0
    %v1229 = vmax.f32 %v1221, 0.0
    %v1230 = vmax.f32 %v1222, 0.0
    %v1231 = vmax.f32 %v1223, 0.0
    %s1232 = scalar_lea.vmem [#allocation7], 64
    %1233 = vst [vmem:[%s1232] sm:$0xff] %v1224
    %1234 = vst [vmem:[%s1232 + $0x8] sm:$0xff] %v1225
    %1235 = vst [vmem:[%s1232 + $0x10] sm:$0xff] %v1226
    %1236 = vst [vmem:[%s1232 + $0x18] sm:$0xff] %v1227
    %1237 = vst [vmem:[%s1232 + $0x20] sm:$0xff] %v1228
    %1238 = vst [vmem:[%s1232 + $0x28] sm:$0xff] %v1229
    %1239 = vst [vmem:[%s1232 + $0x30] sm:$0xff] %v1230
    %1240 = vst [vmem:[%s1232 + $0x38] sm:$0xff] %v1231
    // Predicated region
    $region50: #{tpu_custom_call.1} parent=1 // pred_check
      _
    $region51: #{tpu_custom_call.1} parent=1 // pred_check_branch
      %1242 = sbr.rel (0) target = $region53
    $region52: #{tpu_custom_call.1} parent=1 // pred_region
      %1244 = vsyncadd [#allocation6], 0
      %s1245 = sshll.u32 [#allocation7], 4
      %s1246 = int_to_ptr.vmem [resolvable:$true] %s1245
      %s1247 = sshll.u32 %s11, 4
      %s1248 = int_to_ptr.hbm [resolvable:$true] %s1247
      %1253 = dma.vmem_to_hbm [thread:$0]  %s1246, 2048, %s1248, [#allocation6], 256, 256, 16
    $region53: #{tpu_custom_call.1} parent=1 // pred_fallthru
      _
    // Predicated region
    $region54: #{tpu_custom_call.1} parent=1 // pred_check
      _
    $region55: #{tpu_custom_call.1} parent=1 // pred_check_branch
      %1255 = sbr.rel (0) target = $region57
    $region56: #{tpu_custom_call.1} parent=1 // pred_region
      %1257 = dma.done [#allocation6], 2048
    $region57: #{tpu_custom_call.1} parent=1 // pred_fallthru
      _
    %1258 = vsyncpa [#allocation5], 1
    %1259 = vsyncpa [#allocation6], 1

</llo_original>
